<compile_context>
chip_gen: v7x
topology: tpu7x:2x2x1
jax: 0.10.0
libtpu: 0.0.40
codegen_flags: <defaults>
</compile_context>

<pallas_src>
import functools

import jax
import jax.numpy as jnp
from jax import lax
from jax.experimental import pallas as pl
from jax.experimental.pallas import tpu as pltpu


def _round_up(x, m):
    return ((x + m - 1) // m) * m


def _vmem_budget():
    """Generation-aware VMEM planning: (planning budget, Mosaic scoped-VMEM limit)."""
    cap = 64 * 1024 * 1024                     # conservative fallback (v7x per-TC VMEM)
    try:
        info = pltpu.get_tpu_info()
        cap = int(getattr(info, "vmem_capacity_bytes", cap)) or cap
    except Exception:
        pass
    budget = int(cap * 0.70)                   # what _choose_block_rows plans against
    limit = int(cap * 0.85)                    # scoped-VMEM limit handed to the compiler
    return budget, limit


def _choose_block_rows(n, d, matmul_in_bf16, budget_bytes):
    """Largest row tile whose per-step working set fits the VMEM planning budget."""
    slab_bytes = 2 if matmul_in_bf16 else 4
    min_tile = 16 if matmul_in_bf16 else 8     # bf16 packs two rows per sublane
    cap = _round_up(max(n, 1), min_tile)
    for tm in (512, 256, 128, 64, 32, 16, 8):
        if tm > cap or tm < min_tile:
            continue
        n_pad = _round_up(n, tm)
        est = (n_pad * d * slab_bytes          # resident feature slab (single-buffered)
               + 2 * tm * d * slab_bytes       # double-buffered row tile
               + 6 * tm * n_pad * 4            # (TM,N_pad) f32 temporaries (gram/dist/e/..)
               + 16 * n_pad                    # sq / label row+col blocks
               + 2 * 8 * 128 * 4)              # output slab
        if est <= budget_bytes:
            return tm
    return min_tile


def _stable_softplus(z):
    # log(1 + exp(z)), numerically stable; identical to nn.SoftMarginLoss' per-element term.
    return jnp.maximum(z, 0.0) + jnp.log1p(jnp.exp(-jnp.abs(z)))


def _triplet_adp_kernel(x_row_ref, x_all_ref, sq_row_ref, sq_col_ref,
                        t_row_ref, t_col_ref, out_ref, *,
                        alpha, gamma, square, n_valid, block_rows):
    f32 = jnp.float32

    sq_row = sq_row_ref[...]                              # (TM, 1)    f32 (hoisted)
    sq_col = sq_col_ref[...]                              # (1, N_pad) f32 (hoisted)
    t_r = t_row_ref[...]                                  # (TM, 1)    i32
    t_c = t_col_ref[...]                                  # (1, N_pad) i32
    tm = sq_row.shape[0]
    n_pad = sq_col.shape[1]

    # Gram on the MXU, A·Bᵀ form (no transpose).  Slab / row tile are pre-cast in the
    # wrapper (bf16 feed by default), accumulation stays f32.
    gram = lax.dot_general(x_row_ref[...], x_all_ref[...],
                           (((1,), (1,)), ((), ())),
                           preferred_element_type=f32)    # (TM, N_pad)

    d2 = sq_row + sq_col - 2.0 * gram
    dist = jnp.sqrt(jnp.maximum(d2, 1e-12))               # keep this clamp (MXU rounding)

    is_pos = t_r == t_c
    if n_pad != n_valid:
        col_ok = lax.broadcasted_iota(jnp.int32, (1, n_pad), 1) < n_valid
        pos_mask = jnp.logical_and(is_pos, col_ok)
        neg_mask = jnp.logical_and(jnp.logical_not(is_pos), col_ok)
    else:
        pos_mask = is_pos
        neg_mask = jnp.logical_not(is_pos)

    # ---- weighted-softmax aggregation: ONE exp per tile, per-row exact divide ----
    ad = dist if alpha == 1.0 else alpha * dist            # compile-time alpha guard
    max_p = jnp.max(jnp.where(pos_mask, ad, 0.0), axis=1, keepdims=True)
    max_n = jnp.max(jnp.where(neg_mask, -ad, 0.0), axis=1, keepdims=True)

    s = jnp.where(pos_mask, ad - max_p, -ad - max_n)       # <= 0 everywhere (no overflow)
    e = jnp.exp(s)                                         # single EUP pass
    e_p = jnp.where(pos_mask, e, 0.0)
    e_n = jnp.where(neg_mask, e, 0.0)

    z_p = jnp.sum(e_p, axis=1, keepdims=True) + 1e-6
    z_n = jnp.sum(e_n, axis=1, keepdims=True) + 1e-6
    furthest_positive = jnp.sum(dist * e_p, axis=1, keepdims=True) / z_p   # (TM, 1)
    closest_negative = jnp.sum(dist * e_n, axis=1, keepdims=True) / z_n    # (TM, 1)

    if square == 0:
        margin = gamma * (closest_negative - furthest_positive)
        per_row = _stable_softplus(-margin)
    else:
        diff_pow = jnp.minimum(
            (furthest_positive - closest_negative) ** 2 * gamma, 88.0)
        y = jnp.where(furthest_positive > closest_negative, -1.0, 1.0)
        per_row = _stable_softplus(-y * diff_pow)

    correct_row = (closest_negative >= furthest_positive).astype(f32)

    if n_pad != n_valid:
        row_ids = (pl.program_id(0) * block_rows
                   + lax.broadcasted_iota(jnp.int32, (tm, 1), 0))
        row_ok = row_ids < n_valid
        per_row = jnp.where(row_ok, per_row, 0.0)
        correct_row = jnp.where(row_ok, correct_row, 0.0)

    part_loss = jnp.sum(per_row, axis=0, keepdims=True)     # (1, 1)
    part_corr = jnp.sum(correct_row, axis=0, keepdims=True) # (1, 1)

    # Single lane-dense (8,128) output slab per step: loss on sublane 0, correct on 1..7.
    sub = lax.broadcasted_iota(jnp.int32, (8, 128), 0)
    out_ref[0] = jnp.where(sub == 0,
                           jnp.broadcast_to(part_loss, (8, 128)),
                           jnp.broadcast_to(part_corr, (8, 128)))


def triplet_loss_adp(inputs, targets, *, alpha=1.0, gamma=1.0, square=0,
                     normalize_feature=False, block_rows=None,
                     matmul_in_bf16=True):
    """inputs: (N, D) float; targets: (N,) int labels. Returns (loss, correct_count)."""
    inputs = jnp.asarray(inputs, jnp.float32)
    targets = jnp.asarray(targets, jnp.int32)
    n, d = inputs.shape

    budget_bytes, vmem_limit = _vmem_budget()
    tm = int(block_rows) if block_rows else _choose_block_rows(
        n, d, matmul_in_bf16, budget_bytes)
    n_pad = _round_up(n, tm)
    grid = n_pad // tm

    # ---- hoisted, slab-wide preprocessing (done once, not per grid step) ----
    x = inputs
    if normalize_feature:
        x = x / (jnp.sqrt(jnp.sum(x * x, axis=-1, keepdims=True)) + 1e-12)
    if n_pad != n:
        x = jnp.pad(x, ((0, n_pad - n), (0, 0)))
        t = jnp.pad(targets, (0, n_pad - n))
    else:
        t = targets
    sq = jnp.sum(x * x, axis=1)                           # exact (f32) squared norms
    sq_row = sq.reshape(n_pad, 1)
    sq_col = sq.reshape(1, n_pad)
    x_slab = x.astype(jnp.bfloat16) if matmul_in_bf16 else x
    t_row = t.reshape(n_pad, 1)
    t_col = t.reshape(1, n_pad)

    kernel = functools.partial(
        _triplet_adp_kernel,
        alpha=float(alpha), gamma=float(gamma), square=int(square),
        n_valid=int(n), block_rows=int(tm))

    out_shape = jax.ShapeDtypeStruct((grid, 8, 128), jnp.float32)

    def _call(single_buffer_resident):
        res_kw = ({"pipeline_mode": pl.Buffered(1)}
                  if single_buffer_resident else {})
        in_specs = [
            pl.BlockSpec((tm, d), lambda i: (i, 0)),                # row tile (pipelined)
            pl.BlockSpec((n_pad, d), lambda i: (0, 0), **res_kw),   # feature slab, resident
            pl.BlockSpec((tm, 1), lambda i: (i, 0)),                # sq row tile
            pl.BlockSpec((1, n_pad), lambda i: (0, 0), **res_kw),   # sq_col, resident
            pl.BlockSpec((tm, 1), lambda i: (i, 0)),                # label row tile
            pl.BlockSpec((1, n_pad), lambda i: (0, 0), **res_kw),   # label cols, resident
        ]
        return pl.pallas_call(
            kernel,
            out_shape=out_shape,
            grid_spec=pltpu.PrefetchScalarGridSpec(
                num_scalar_prefetch=0,
                grid=(grid,),
                in_specs=in_specs,
                out_specs=pl.BlockSpec((1, 8, 128), lambda i: (i, 0, 0)),
            ),
            compiler_params=pltpu.CompilerParams(
                dimension_semantics=("parallel",),
                vmem_limit_bytes=vmem_limit),
        )(x_slab, x_slab, sq_row, sq_col, t_row, t_col)

    try:
        parts = _call(True)
    except Exception:
        # Fallback for Pallas builds without pipeline_mode on pallas_call: identical
        # kernel, resident inputs simply get the default double buffering.
        parts = _call(False)

    loss = jnp.sum(parts[:, 0, 0]) / float(n)
    correct = jnp.sum(parts[:, 1, 0]).astype(jnp.int32)
    return loss, correct


def _reference(inputs, targets, alpha=1.0, gamma=1.0, square=0,
               normalize_feature=False, gram_in_bf16=False):
    """Pure-JAX port of the PyTorch TripletLoss_ADP forward (stable softplus form)."""
    x = inputs.astype(jnp.float32)
    if normalize_feature:
        x = x / (jnp.linalg.norm(x, axis=-1, keepdims=True) + 1e-12)
    sq = jnp.sum(x * x, axis=1, keepdims=True)
    if gram_in_bf16:
        xb = x.astype(jnp.bfloat16)
        gram = jnp.dot(xb, xb.T, preferred_element_type=jnp.float32)
    else:
        gram = jnp.dot(x, x.T, precision=lax.Precision.HIGHEST)
    dist = jnp.sqrt(jnp.maximum(sq + sq.T - 2.0 * gram, 1e-12))
    t = targets.reshape(-1, 1)
    is_pos = (t == t.T).astype(jnp.float32)
    is_neg = 1.0 - is_pos
    dap, dan = dist * is_pos, dist * is_neg

    def sw(dd, m):
        mv = jnp.max(dd * m, axis=1, keepdims=True)
        e = jnp.exp(dd - mv)
        z = jnp.sum(e * m, axis=1, keepdims=True) + 1e-6
        return e * m / z

    fp = jnp.sum(dap * sw(dap * alpha, is_pos), axis=1)
    cn = jnp.sum(dan * sw(-dan * alpha, is_neg), axis=1)

    if square == 0:
        loss = jnp.mean(_stable_softplus(-gamma * (cn - fp)))
    else:
        diff_pow = jnp.minimum((fp - cn) ** 2 * gamma, 88.0)
        y = jnp.where(fp > cn, -1.0, 1.0)
        loss = jnp.mean(_stable_softplus(-y * diff_pow))
    correct = jnp.sum((cn >= fp).astype(jnp.int32))
    return loss, correct


if __name__ == "__main__":
    key = jax.random.PRNGKey(0)
    # N=18 deliberately not a multiple of the row tile -> exercises padding masks.
    n, d = 18, 64
    x = jax.random.normal(key, (n, d), dtype=jnp.float32)
    targets = jnp.array([i // 3 for i in range(n)], dtype=jnp.int32)   # 6 classes x 3

    for cfg in (dict(square=0, normalize_feature=False),
                dict(square=1, normalize_feature=True)):
        # Exact f32 MXU feed with a forced small row tile -> multi-step grid + padding.
        loss, correct = triplet_loss_adp(x, targets, alpha=1.0, gamma=1.0,
                                         matmul_in_bf16=False, block_rows=8, **cfg)
        jax.block_until_ready((loss, correct))
        rl, rc = _reference(x, targets, alpha=1.0, gamma=1.0, **cfg)
        assert jnp.allclose(loss, rl, atol=1e-4, rtol=1e-4), (cfg, loss, rl)
        assert int(correct) == int(rc), (cfg, correct, rc)

        # Default fast path: auto row tile, bf16 MXU feed (f32 accumulate), vs. a
        # bf16-gram-mirrored reference.
        loss, correct = triplet_loss_adp(x, targets, alpha=1.0, gamma=1.0, **cfg)
        jax.block_until_ready((loss, correct))
        rl, rc = _reference(x, targets, alpha=1.0, gamma=1.0, gram_in_bf16=True, **cfg)
        assert jnp.allclose(loss, rl, atol=2e-3, rtol=2e-3), (cfg, loss, rl)
        assert int(correct) == int(rc), (cfg, correct, rc)

    print("KERNEL_OK")
</pallas_src>

<mosaic_0001>
module attributes {stable_mosaic.version = 11 : i64} {
  func.func @_triplet_adp_kernel(%arg0: i32, %arg1: memref<8x64xf32, #tpu.memory_space<vmem>>, %arg2: memref<24x64xf32, #tpu.memory_space<vmem>>, %arg3: memref<8x1xf32, #tpu.memory_space<vmem>>, %arg4: memref<1x24xf32, #tpu.memory_space<vmem>>, %arg5: memref<8x1xi32, #tpu.memory_space<vmem>>, %arg6: memref<1x24xi32, #tpu.memory_space<vmem>>, %arg7: memref<1x8x128xf32, #tpu.memory_space<vmem>>) attributes {dimension_semantics = [#tpu.dimension_semantics<parallel>], iteration_bounds = array<i64: 3>, scalar_prefetch = 0 : i64, scratch_operands = 0 : i64, tpu.core_type = #tpu.core_type<tc>, window_params = [{transform_indices = @transform_0, window_bounds = array<i64: 8, 64>}, {pipeline_mode = #tpu.pipeline_mode<synchronous>, transform_indices = @transform_1, window_bounds = array<i64: 24, 64>}, {transform_indices = @transform_2, window_bounds = array<i64: 8, 1>}, {pipeline_mode = #tpu.pipeline_mode<synchronous>, transform_indices = @transform_3, window_bounds = array<i64: 1, 24>}, {transform_indices = @transform_4, window_bounds = array<i64: 8, 1>}, {pipeline_mode = #tpu.pipeline_mode<synchronous>, transform_indices = @transform_5, window_bounds = array<i64: 1, 24>}, {transform_indices = @transform_6, window_bounds = array<i64: 1, 8, 128>}]} {
    %c0 = arith.constant 0 : index
    %c0_0 = arith.constant 0 : index
    %0 = vector.load %arg3[%c0, %c0_0] : memref<8x1xf32, #tpu.memory_space<vmem>>, vector<8x1xf32>
    %c0_1 = arith.constant 0 : index
    %c0_2 = arith.constant 0 : index
    %1 = vector.load %arg4[%c0_1, %c0_2] : memref<1x24xf32, #tpu.memory_space<vmem>>, vector<1x24xf32>
    %c0_3 = arith.constant 0 : index
    %c0_4 = arith.constant 0 : index
    %2 = vector.load %arg5[%c0_3, %c0_4] : memref<8x1xi32, #tpu.memory_space<vmem>>, vector<8x1xi32>
    %c0_5 = arith.constant 0 : index
    %c0_6 = arith.constant 0 : index
    %3 = vector.load %arg6[%c0_5, %c0_6] : memref<1x24xi32, #tpu.memory_space<vmem>>, vector<1x24xi32>
    %c0_7 = arith.constant 0 : index
    %c0_8 = arith.constant 0 : index
    %4 = vector.load %arg1[%c0_7, %c0_8] : memref<8x64xf32, #tpu.memory_space<vmem>>, vector<8x64xf32>
    %c0_9 = arith.constant 0 : index
    %c0_10 = arith.constant 0 : index
    %5 = vector.load %arg2[%c0_9, %c0_10] : memref<24x64xf32, #tpu.memory_space<vmem>>, vector<24x64xf32>
    %cst = arith.constant dense<0.000000e+00> : vector<8x24xf32>
    %6 = tpu.matmul %4, %5, %cst {dimension_numbers = #tpu.dot_dimension_numbers<[1], [1], [0], [0], [0, 0, 1, 0], [], []>} : vector<8x64xf32>, vector<24x64xf32>, vector<8x24xf32> -> vector<8x24xf32>
    %7 = vector.broadcast %0 : vector<8x1xf32> to vector<8x24xf32>
    %8 = vector.broadcast %1 : vector<1x24xf32> to vector<8x24xf32>
    %9 = arith.addf %7, %8 : vector<8x24xf32>
    %cst_11 = arith.constant 2.000000e+00 : f32
    %10 = vector.broadcast %cst_11 : f32 to vector<8x24xf32>
    %11 = arith.mulf %10, %6 : vector<8x24xf32>
    %12 = arith.subf %9, %11 : vector<8x24xf32>
    %cst_12 = arith.constant 9.99999996E-13 : f32
    %13 = vector.broadcast %cst_12 : f32 to vector<8x24xf32>
    %14 = arith.maximumf %12, %13 : vector<8x24xf32>
    %15 = math.sqrt %14 : vector<8x24xf32>
    %16 = vector.broadcast %2 : vector<8x1xi32> to vector<8x24xi32>
    %17 = vector.broadcast %3 : vector<1x24xi32> to vector<8x24xi32>
    %18 = arith.cmpi eq, %16, %17 : vector<8x24xi32>
    %19 = tpu.iota {dimensions = array<i32: 1>} : vector<1x24xi32>
    %c18_i32 = arith.constant 18 : i32
    %20 = vector.broadcast %c18_i32 : i32 to vector<1x24xi32>
    %21 = arith.cmpi slt, %19, %20 : vector<1x24xi32>
    %22 = vector.broadcast %21 : vector<1x24xi1> to vector<8x24xi1>
    %23 = arith.andi %18, %22 : vector<8x24xi1>
    %cst_13 = arith.constant dense<true> : vector<8x24xi1>
    %24 = arith.xori %18, %cst_13 : vector<8x24xi1>
    %25 = vector.broadcast %21 : vector<1x24xi1> to vector<8x24xi1>
    %26 = arith.andi %24, %25 : vector<8x24xi1>
    %cst_14 = arith.constant 0.000000e+00 : f32
    %27 = vector.broadcast %cst_14 : f32 to vector<8x24xf32>
    %28 = arith.select %23, %15, %27 : vector<8x24xi1>, vector<8x24xf32>
    %cst_15 = arith.constant dense<0xFF800000> : vector<8xf32>
    %29 = vector.multi_reduction <maximumf>, %28, %cst_15 [1] : vector<8x24xf32> to vector<8xf32>
    %30 = vector.shape_cast %29 : vector<8xf32> to vector<8x1xf32>
    %cst_16 = arith.constant 0.000000e+00 : f32
    %31 = vector.broadcast %cst_16 : f32 to vector<8x24xf32>
    %32 = arith.subf %31, %15 : vector<8x24xf32>
    %cst_17 = arith.constant 0.000000e+00 : f32
    %33 = vector.broadcast %cst_17 : f32 to vector<8x24xf32>
    %34 = arith.select %26, %32, %33 : vector<8x24xi1>, vector<8x24xf32>
    %cst_18 = arith.constant dense<0xFF800000> : vector<8xf32>
    %35 = vector.multi_reduction <maximumf>, %34, %cst_18 [1] : vector<8x24xf32> to vector<8xf32>
    %36 = vector.shape_cast %35 : vector<8xf32> to vector<8x1xf32>
    %37 = vector.broadcast %30 : vector<8x1xf32> to vector<8x24xf32>
    %38 = arith.subf %15, %37 : vector<8x24xf32>
    %cst_19 = arith.constant 0.000000e+00 : f32
    %39 = vector.broadcast %cst_19 : f32 to vector<8x24xf32>
    %40 = arith.subf %39, %15 : vector<8x24xf32>
    %41 = vector.broadcast %36 : vector<8x1xf32> to vector<8x24xf32>
    %42 = arith.subf %40, %41 : vector<8x24xf32>
    %43 = arith.select %23, %38, %42 : vector<8x24xi1>, vector<8x24xf32>
    %44 = math.exp %43 : vector<8x24xf32>
    %cst_20 = arith.constant 0.000000e+00 : f32
    %45 = vector.broadcast %cst_20 : f32 to vector<8x24xf32>
    %46 = arith.select %23, %44, %45 : vector<8x24xi1>, vector<8x24xf32>
    %cst_21 = arith.constant 0.000000e+00 : f32
    %47 = vector.broadcast %cst_21 : f32 to vector<8x24xf32>
    %48 = arith.select %26, %44, %47 : vector<8x24xi1>, vector<8x24xf32>
    %cst_22 = arith.constant dense<0.000000e+00> : vector<8xf32>
    %49 = vector.multi_reduction <add>, %46, %cst_22 [1] : vector<8x24xf32> to vector<8xf32>
    %50 = vector.shape_cast %49 : vector<8xf32> to vector<8x1xf32>
    %cst_23 = arith.constant 9.99999997E-7 : f32
    %51 = vector.broadcast %cst_23 : f32 to vector<8x1xf32>
    %52 = arith.addf %50, %51 : vector<8x1xf32>
    %cst_24 = arith.constant dense<0.000000e+00> : vector<8xf32>
    %53 = vector.multi_reduction <add>, %48, %cst_24 [1] : vector<8x24xf32> to vector<8xf32>
    %54 = vector.shape_cast %53 : vector<8xf32> to vector<8x1xf32>
    %cst_25 = arith.constant 9.99999997E-7 : f32
    %55 = vector.broadcast %cst_25 : f32 to vector<8x1xf32>
    %56 = arith.addf %54, %55 : vector<8x1xf32>
    %57 = arith.mulf %15, %46 : vector<8x24xf32>
    %cst_26 = arith.constant dense<0.000000e+00> : vector<8xf32>
    %58 = vector.multi_reduction <add>, %57, %cst_26 [1] : vector<8x24xf32> to vector<8xf32>
    %59 = vector.shape_cast %58 : vector<8xf32> to vector<8x1xf32>
    %60 = arith.divf %59, %52 : vector<8x1xf32>
    %61 = arith.mulf %15, %48 : vector<8x24xf32>
    %cst_27 = arith.constant dense<0.000000e+00> : vector<8xf32>
    %62 = vector.multi_reduction <add>, %61, %cst_27 [1] : vector<8x24xf32> to vector<8xf32>
    %63 = vector.shape_cast %62 : vector<8xf32> to vector<8x1xf32>
    %64 = arith.divf %63, %56 : vector<8x1xf32>
    %65 = arith.subf %64, %60 : vector<8x1xf32>
    %cst_28 = arith.constant 1.000000e+00 : f32
    %66 = vector.broadcast %cst_28 : f32 to vector<8x1xf32>
    %67 = arith.mulf %66, %65 : vector<8x1xf32>
    %cst_29 = arith.constant 0.000000e+00 : f32
    %68 = vector.broadcast %cst_29 : f32 to vector<8x1xf32>
    %69 = arith.subf %68, %67 : vector<8x1xf32>
    %cst_30 = arith.constant 0.000000e+00 : f32
    %70 = vector.broadcast %cst_30 : f32 to vector<8x1xf32>
    %71 = arith.maximumf %69, %70 : vector<8x1xf32>
    %72 = math.absf %69 : vector<8x1xf32>
    %cst_31 = arith.constant 0.000000e+00 : f32
    %73 = vector.broadcast %cst_31 : f32 to vector<8x1xf32>
    %74 = arith.subf %73, %72 : vector<8x1xf32>
    %75 = math.exp %74 : vector<8x1xf32>
    %76 = math.log1p %75 : vector<8x1xf32>
    %77 = arith.addf %71, %76 : vector<8x1xf32>
    %78 = arith.cmpf oge, %64, %60 : vector<8x1xf32>
    %79 = arith.extui %78 : vector<8x1xi1> to vector<8x1xi32>
    %80 = arith.sitofp %79 : vector<8x1xi32> to vector<8x1xf32>
    %c8_i32 = arith.constant 8 : i32
    %81 = arith.muli %arg0, %c8_i32 : i32
    %82 = tpu.iota {dimensions = array<i32: 0>} : vector<8x1xi32>
    %83 = vector.broadcast %81 : i32 to vector<8x1xi32>
    %84 = arith.addi %83, %82 : vector<8x1xi32>
    %c18_i32_32 = arith.constant 18 : i32
    %85 = vector.broadcast %c18_i32_32 : i32 to vector<8x1xi32>
    %86 = arith.cmpi slt, %84, %85 : vector<8x1xi32>
    %cst_33 = arith.constant 0.000000e+00 : f32
    %87 = vector.broadcast %cst_33 : f32 to vector<8x1xf32>
    %88 = arith.select %86, %77, %87 : vector<8x1xi1>, vector<8x1xf32>
    %cst_34 = arith.constant 0.000000e+00 : f32
    %89 = vector.broadcast %cst_34 : f32 to vector<8x1xf32>
    %90 = arith.select %86, %80, %89 : vector<8x1xi1>, vector<8x1xf32>
    %cst_35 = arith.constant dense<0.000000e+00> : vector<1xf32>
    %91 = vector.multi_reduction <add>, %88, %cst_35 [0] : vector<8x1xf32> to vector<1xf32>
    %92 = vector.shape_cast %91 : vector<1xf32> to vector<1x1xf32>
    %cst_36 = arith.constant dense<0.000000e+00> : vector<1xf32>
    %93 = vector.multi_reduction <add>, %90, %cst_36 [0] : vector<8x1xf32> to vector<1xf32>
    %94 = vector.shape_cast %93 : vector<1xf32> to vector<1x1xf32>
    %95 = tpu.iota {dimensions = array<i32: 0>} : vector<8x128xi32>
    %c0_i32 = arith.constant 0 : i32
    %96 = vector.broadcast %c0_i32 : i32 to vector<8x128xi32>
    %97 = arith.cmpi eq, %95, %96 : vector<8x128xi32>
    %98 = vector.shape_cast %92 : vector<1x1xf32> to vector<1x1xf32>
    %99 = vector.broadcast %98 : vector<1x1xf32> to vector<8x128xf32>
    %100 = vector.shape_cast %94 : vector<1x1xf32> to vector<1x1xf32>
    %101 = vector.broadcast %100 : vector<1x1xf32> to vector<8x128xf32>
    %102 = arith.select %97, %99, %101 : vector<8x128xi1>, vector<8x128xf32>
    %c0_37 = arith.constant 0 : index
    %c0_38 = arith.constant 0 : index
    %c0_39 = arith.constant 0 : index
    %103 = vector.load %arg7[%c0_37, %c0_38, %c0_39] : memref<1x8x128xf32, #tpu.memory_space<vmem>>, vector<1x8x128xf32>
    %104 = vector.shape_cast %103 : vector<1x8x128xf32> to vector<8x128xf32>
    %105 = vector.shape_cast %102 : vector<8x128xf32> to vector<1x8x128xf32>
    tpu.vector_store %arg7[%c0_37, %c0_38, %c0_39], %105 {strides = array<i32>} : memref<1x8x128xf32, #tpu.memory_space<vmem>>, vector<1x8x128xf32>,
    return
  }
  func.func @transform_0(%arg0: i32) -> (i32, i32) {
    %c0_i32 = arith.constant 0 : i32
    %c0_i32_0 = arith.constant 0 : i32
    return %arg0, %c0_i32 : i32, i32
  }
  func.func @transform_1(%arg0: i32) -> (i32, i32) {
    %c0_i32 = arith.constant 0 : i32
    %c0_i32_0 = arith.constant 0 : i32
    %c0_i32_1 = arith.constant 0 : i32
    return %c0_i32, %c0_i32_0 : i32, i32
  }
  func.func @transform_2(%arg0: i32) -> (i32, i32) {
    %c0_i32 = arith.constant 0 : i32
    %c0_i32_0 = arith.constant 0 : i32
    return %arg0, %c0_i32 : i32, i32
  }
  func.func @transform_3(%arg0: i32) -> (i32, i32) {
    %c0_i32 = arith.constant 0 : i32
    %c0_i32_0 = arith.constant 0 : i32
    %c0_i32_1 = arith.constant 0 : i32
    return %c0_i32, %c0_i32_0 : i32, i32
  }
  func.func @transform_4(%arg0: i32) -> (i32, i32) {
    %c0_i32 = arith.constant 0 : i32
    %c0_i32_0 = arith.constant 0 : i32
    return %arg0, %c0_i32 : i32, i32
  }
  func.func @transform_5(%arg0: i32) -> (i32, i32) {
    %c0_i32 = arith.constant 0 : i32
    %c0_i32_0 = arith.constant 0 : i32
    %c0_i32_1 = arith.constant 0 : i32
    return %c0_i32, %c0_i32_0 : i32, i32
  }
  func.func @transform_6(%arg0: i32) -> (i32, i32, i32) {
    %c0_i32 = arith.constant 0 : i32
    %c0_i32_0 = arith.constant 0 : i32
    %c0_i32_1 = arith.constant 0 : i32
    return %arg0, %c0_i32, %c0_i32_0 : i32, i32, i32
  }
}

module attributes {stable_mosaic.version = 11 : i64} {
  func.func @_triplet_adp_kernel(%arg0: i32, %arg1: memref<8x64xf32, #tpu.memory_space<vmem>>, %arg2: memref<24x64xf32, #tpu.memory_space<vmem>>, %arg3: memref<8x1xf32, #tpu.memory_space<vmem>>, %arg4: memref<1x24xf32, #tpu.memory_space<vmem>>, %arg5: memref<8x1xi32, #tpu.memory_space<vmem>>, %arg6: memref<1x24xi32, #tpu.memory_space<vmem>>, %arg7: memref<1x8x128xf32, #tpu.memory_space<vmem>>) attributes {dimension_semantics = [#tpu.dimension_semantics<parallel>], iteration_bounds = array<i64: 3>, scalar_prefetch = 0 : i64, scratch_operands = 0 : i64, tpu.core_type = #tpu.core_type<tc>, window_params = [{transform_indices = @transform_0, window_bounds = array<i64: 8, 64>}, {pipeline_mode = #tpu.pipeline_mode<synchronous>, transform_indices = @transform_1, window_bounds = array<i64: 24, 64>}, {transform_indices = @transform_2, window_bounds = array<i64: 8, 1>}, {pipeline_mode = #tpu.pipeline_mode<synchronous>, transform_indices = @transform_3, window_bounds = array<i64: 1, 24>}, {transform_indices = @transform_4, window_bounds = array<i64: 8, 1>}, {pipeline_mode = #tpu.pipeline_mode<synchronous>, transform_indices = @transform_5, window_bounds = array<i64: 1, 24>}, {transform_indices = @transform_6, window_bounds = array<i64: 1, 8, 128>}]} {
    %c0 = arith.constant 0 : index
    %c0_0 = arith.constant 0 : index
    %0 = vector.load %arg3[%c0, %c0_0] : memref<8x1xf32, #tpu.memory_space<vmem>>, vector<8x1xf32>
    %c0_1 = arith.constant 0 : index
    %c0_2 = arith.constant 0 : index
    %1 = vector.load %arg4[%c0_1, %c0_2] : memref<1x24xf32, #tpu.memory_space<vmem>>, vector<1x24xf32>
    %c0_3 = arith.constant 0 : index
    %c0_4 = arith.constant 0 : index
    %2 = vector.load %arg5[%c0_3, %c0_4] : memref<8x1xi32, #tpu.memory_space<vmem>>, vector<8x1xi32>
    %c0_5 = arith.constant 0 : index
    %c0_6 = arith.constant 0 : index
    %3 = vector.load %arg6[%c0_5, %c0_6] : memref<1x24xi32, #tpu.memory_space<vmem>>, vector<1x24xi32>
    %c0_7 = arith.constant 0 : index
    %c0_8 = arith.constant 0 : index
    %4 = vector.load %arg1[%c0_7, %c0_8] : memref<8x64xf32, #tpu.memory_space<vmem>>, vector<8x64xf32>
    %c0_9 = arith.constant 0 : index
    %c0_10 = arith.constant 0 : index
    %5 = vector.load %arg2[%c0_9, %c0_10] : memref<24x64xf32, #tpu.memory_space<vmem>>, vector<24x64xf32>
    %cst = arith.constant dense<0.000000e+00> : vector<8x24xf32>
    %6 = tpu.matmul %4, %5, %cst {dimension_numbers = #tpu.dot_dimension_numbers<[1], [1], [0], [0], [0, 0, 1, 0], [], []>} : vector<8x64xf32>, vector<24x64xf32>, vector<8x24xf32> -> vector<8x24xf32>
    %7 = vector.broadcast %0 : vector<8x1xf32> to vector<8x24xf32>
    %8 = vector.broadcast %1 : vector<1x24xf32> to vector<8x24xf32>
    %9 = arith.addf %7, %8 : vector<8x24xf32>
    %cst_11 = arith.constant 2.000000e+00 : f32
    %10 = vector.broadcast %cst_11 : f32 to vector<8x24xf32>
    %11 = arith.mulf %10, %6 : vector<8x24xf32>
    %12 = arith.subf %9, %11 : vector<8x24xf32>
    %cst_12 = arith.constant 9.99999996E-13 : f32
    %13 = vector.broadcast %cst_12 : f32 to vector<8x24xf32>
    %14 = arith.maximumf %12, %13 : vector<8x24xf32>
    %15 = math.sqrt %14 : vector<8x24xf32>
    %16 = vector.broadcast %2 : vector<8x1xi32> to vector<8x24xi32>
    %17 = vector.broadcast %3 : vector<1x24xi32> to vector<8x24xi32>
    %18 = arith.cmpi eq, %16, %17 : vector<8x24xi32>
    %19 = tpu.iota {dimensions = array<i32: 1>} : vector<1x24xi32>
    %c18_i32 = arith.constant 18 : i32
    %20 = vector.broadcast %c18_i32 : i32 to vector<1x24xi32>
    %21 = arith.cmpi slt, %19, %20 : vector<1x24xi32>
    %22 = vector.broadcast %21 : vector<1x24xi1> to vector<8x24xi1>
    %23 = arith.andi %18, %22 : vector<8x24xi1>
    %cst_13 = arith.constant dense<true> : vector<8x24xi1>
    %24 = arith.xori %18, %cst_13 : vector<8x24xi1>
    %25 = vector.broadcast %21 : vector<1x24xi1> to vector<8x24xi1>
    %26 = arith.andi %24, %25 : vector<8x24xi1>
    %cst_14 = arith.constant 0.000000e+00 : f32
    %27 = vector.broadcast %cst_14 : f32 to vector<8x24xf32>
    %28 = arith.select %23, %15, %27 : vector<8x24xi1>, vector<8x24xf32>
    %cst_15 = arith.constant dense<0xFF800000> : vector<8xf32>
    %29 = vector.multi_reduction <maximumf>, %28, %cst_15 [1] : vector<8x24xf32> to vector<8xf32>
    %30 = vector.shape_cast %29 : vector<8xf32> to vector<8x1xf32>
    %cst_16 = arith.constant 0.000000e+00 : f32
    %31 = vector.broadcast %cst_16 : f32 to vector<8x24xf32>
    %32 = arith.subf %31, %15 : vector<8x24xf32>
    %cst_17 = arith.constant 0.000000e+00 : f32
    %33 = vector.broadcast %cst_17 : f32 to vector<8x24xf32>
    %34 = arith.select %26, %32, %33 : vector<8x24xi1>, vector<8x24xf32>
    %cst_18 = arith.constant dense<0xFF800000> : vector<8xf32>
    %35 = vector.multi_reduction <maximumf>, %34, %cst_18 [1] : vector<8x24xf32> to vector<8xf32>
    %36 = vector.shape_cast %35 : vector<8xf32> to vector<8x1xf32>
    %37 = vector.broadcast %30 : vector<8x1xf32> to vector<8x24xf32>
    %38 = arith.subf %15, %37 : vector<8x24xf32>
    %cst_19 = arith.constant 0.000000e+00 : f32
    %39 = vector.broadcast %cst_19 : f32 to vector<8x24xf32>
    %40 = arith.subf %39, %15 : vector<8x24xf32>
    %41 = vector.broadcast %36 : vector<8x1xf32> to vector<8x24xf32>
    %42 = arith.subf %40, %41 : vector<8x24xf32>
    %43 = arith.select %23, %38, %42 : vector<8x24xi1>, vector<8x24xf32>
    %44 = math.exp %43 : vector<8x24xf32>
    %cst_20 = arith.constant 0.000000e+00 : f32
    %45 = vector.broadcast %cst_20 : f32 to vector<8x24xf32>
    %46 = arith.select %23, %44, %45 : vector<8x24xi1>, vector<8x24xf32>
    %cst_21 = arith.constant 0.000000e+00 : f32
    %47 = vector.broadcast %cst_21 : f32 to vector<8x24xf32>
    %48 = arith.select %26, %44, %47 : vector<8x24xi1>, vector<8x24xf32>
    %cst_22 = arith.constant dense<0.000000e+00> : vector<8xf32>
    %49 = vector.multi_reduction <add>, %46, %cst_22 [1] : vector<8x24xf32> to vector<8xf32>
    %50 = vector.shape_cast %49 : vector<8xf32> to vector<8x1xf32>
    %cst_23 = arith.constant 9.99999997E-7 : f32
    %51 = vector.broadcast %cst_23 : f32 to vector<8x1xf32>
    %52 = arith.addf %50, %51 : vector<8x1xf32>
    %cst_24 = arith.constant dense<0.000000e+00> : vector<8xf32>
    %53 = vector.multi_reduction <add>, %48, %cst_24 [1] : vector<8x24xf32> to vector<8xf32>
    %54 = vector.shape_cast %53 : vector<8xf32> to vector<8x1xf32>
    %cst_25 = arith.constant 9.99999997E-7 : f32
    %55 = vector.broadcast %cst_25 : f32 to vector<8x1xf32>
    %56 = arith.addf %54, %55 : vector<8x1xf32>
    %57 = arith.mulf %15, %46 : vector<8x24xf32>
    %cst_26 = arith.constant dense<0.000000e+00> : vector<8xf32>
    %58 = vector.multi_reduction <add>, %57, %cst_26 [1] : vector<8x24xf32> to vector<8xf32>
    %59 = vector.shape_cast %58 : vector<8xf32> to vector<8x1xf32>
    %60 = arith.divf %59, %52 : vector<8x1xf32>
    %61 = arith.mulf %15, %48 : vector<8x24xf32>
    %cst_27 = arith.constant dense<0.000000e+00> : vector<8xf32>
    %62 = vector.multi_reduction <add>, %61, %cst_27 [1] : vector<8x24xf32> to vector<8xf32>
    %63 = vector.shape_cast %62 : vector<8xf32> to vector<8x1xf32>
    %64 = arith.divf %63, %56 : vector<8x1xf32>
    %65 = arith.subf %64, %60 : vector<8x1xf32>
    %cst_28 = arith.constant 1.000000e+00 : f32
    %66 = vector.broadcast %cst_28 : f32 to vector<8x1xf32>
    %67 = arith.mulf %66, %65 : vector<8x1xf32>
    %cst_29 = arith.constant 0.000000e+00 : f32
    %68 = vector.broadcast %cst_29 : f32 to vector<8x1xf32>
    %69 = arith.subf %68, %67 : vector<8x1xf32>
    %cst_30 = arith.constant 0.000000e+00 : f32
    %70 = vector.broadcast %cst_30 : f32 to vector<8x1xf32>
    %71 = arith.maximumf %69, %70 : vector<8x1xf32>
    %72 = math.absf %69 : vector<8x1xf32>
    %cst_31 = arith.constant 0.000000e+00 : f32
    %73 = vector.broadcast %cst_31 : f32 to vector<8x1xf32>
    %74 = arith.subf %73, %72 : vector<8x1xf32>
    %75 = math.exp %74 : vector<8x1xf32>
    %76 = math.log1p %75 : vector<8x1xf32>
    %77 = arith.addf %71, %76 : vector<8x1xf32>
    %78 = arith.cmpf oge, %64, %60 : vector<8x1xf32>
    %79 = arith.extui %78 : vector<8x1xi1> to vector<8x1xi32>
    %80 = arith.sitofp %79 : vector<8x1xi32> to vector<8x1xf32>
    %c8_i32 = arith.constant 8 : i32
    %81 = arith.muli %arg0, %c8_i32 : i32
    %82 = tpu.iota {dimensions = array<i32: 0>} : vector<8x1xi32>
    %83 = vector.broadcast %81 : i32 to vector<8x1xi32>
    %84 = arith.addi %83, %82 : vector<8x1xi32>
    %c18_i32_32 = arith.constant 18 : i32
    %85 = vector.broadcast %c18_i32_32 : i32 to vector<8x1xi32>
    %86 = arith.cmpi slt, %84, %85 : vector<8x1xi32>
    %cst_33 = arith.constant 0.000000e+00 : f32
    %87 = vector.broadcast %cst_33 : f32 to vector<8x1xf32>
    %88 = arith.select %86, %77, %87 : vector<8x1xi1>, vector<8x1xf32>
    %cst_34 = arith.constant 0.000000e+00 : f32
    %89 = vector.broadcast %cst_34 : f32 to vector<8x1xf32>
    %90 = arith.select %86, %80, %89 : vector<8x1xi1>, vector<8x1xf32>
    %cst_35 = arith.constant dense<0.000000e+00> : vector<1xf32>
    %91 = vector.multi_reduction <add>, %88, %cst_35 [0] : vector<8x1xf32> to vector<1xf32>
    %92 = vector.shape_cast %91 : vector<1xf32> to vector<1x1xf32>
    %cst_36 = arith.constant dense<0.000000e+00> : vector<1xf32>
    %93 = vector.multi_reduction <add>, %90, %cst_36 [0] : vector<8x1xf32> to vector<1xf32>
    %94 = vector.shape_cast %93 : vector<1xf32> to vector<1x1xf32>
    %95 = tpu.iota {dimensions = array<i32: 0>} : vector<8x128xi32>
    %c0_i32 = arith.constant 0 : i32
    %96 = vector.broadcast %c0_i32 : i32 to vector<8x128xi32>
    %97 = arith.cmpi eq, %95, %96 : vector<8x128xi32>
    %98 = vector.shape_cast %92 : vector<1x1xf32> to vector<1x1xf32>
    %99 = vector.broadcast %98 : vector<1x1xf32> to vector<8x128xf32>
    %100 = vector.shape_cast %94 : vector<1x1xf32> to vector<1x1xf32>
    %101 = vector.broadcast %100 : vector<1x1xf32> to vector<8x128xf32>
    %102 = arith.select %97, %99, %101 : vector<8x128xi1>, vector<8x128xf32>
    %c0_37 = arith.constant 0 : index
    %c0_38 = arith.constant 0 : index
    %c0_39 = arith.constant 0 : index
    %103 = vector.load %arg7[%c0_37, %c0_38, %c0_39] : memref<1x8x128xf32, #tpu.memory_space<vmem>>, vector<1x8x128xf32>
    %104 = vector.shape_cast %103 : vector<1x8x128xf32> to vector<8x128xf32>
    %105 = vector.shape_cast %102 : vector<8x128xf32> to vector<1x8x128xf32>
    tpu.vector_store %arg7[%c0_37, %c0_38, %c0_39], %105 {strides = array<i32>} : memref<1x8x128xf32, #tpu.memory_space<vmem>>, vector<1x8x128xf32>,
    return
  }
  func.func @transform_0(%arg0: i32) -> (i32, i32) {
    %c0_i32 = arith.constant 0 : i32
    %c0_i32_0 = arith.constant 0 : i32
    return %arg0, %c0_i32 : i32, i32
  }
  func.func @transform_1(%arg0: i32) -> (i32, i32) {
    %c0_i32 = arith.constant 0 : i32
    %c0_i32_0 = arith.constant 0 : i32
    %c0_i32_1 = arith.constant 0 : i32
    return %c0_i32, %c0_i32_0 : i32, i32
  }
  func.func @transform_2(%arg0: i32) -> (i32, i32) {
    %c0_i32 = arith.constant 0 : i32
    %c0_i32_0 = arith.constant 0 : i32
    return %arg0, %c0_i32 : i32, i32
  }
  func.func @transform_3(%arg0: i32) -> (i32, i32) {
    %c0_i32 = arith.constant 0 : i32
    %c0_i32_0 = arith.constant 0 : i32
    %c0_i32_1 = arith.constant 0 : i32
    return %c0_i32, %c0_i32_0 : i32, i32
  }
  func.func @transform_4(%arg0: i32) -> (i32, i32) {
    %c0_i32 = arith.constant 0 : i32
    %c0_i32_0 = arith.constant 0 : i32
    return %arg0, %c0_i32 : i32, i32
  }
  func.func @transform_5(%arg0: i32) -> (i32, i32) {
    %c0_i32 = arith.constant 0 : i32
    %c0_i32_0 = arith.constant 0 : i32
    %c0_i32_1 = arith.constant 0 : i32
    return %c0_i32, %c0_i32_0 : i32, i32
  }
  func.func @transform_6(%arg0: i32) -> (i32, i32, i32) {
    %c0_i32 = arith.constant 0 : i32
    %c0_i32_0 = arith.constant 0 : i32
    %c0_i32_1 = arith.constant 0 : i32
    return %arg0, %c0_i32, %c0_i32_0 : i32, i32, i32
  }
}

</mosaic_0001>

<llo_original>
// kernel: tpu_custom_call.1
$region0: #{tpu_custom_call.1}
  #allocation0 [shape = 'u32[]', space=smem, size = 0x4, offset = 0x4, fixed_abs, tag = 'smem constant byte address 0x4 - core index']
  #allocation1 [shape = 'u32[144,128]{1,0:T(1,128)}', space=vmem, size = 0x12000, scoped, tag = 'internal scratch']
  %s0 = inlined_call_operand.vmem [shape: f32[24,64], index: 0, kind: input, shape index: {}]
  %s1 = inlined_call_operand.vmem [shape: f32[24,64], index: 1, kind: input, shape index: {}]
  %s2 = inlined_call_operand.vmem [shape: f32[24,1], index: 2, kind: input, shape index: {}]
  %s3 = inlined_call_operand.vmem [shape: f32[1,24], index: 3, kind: input, shape index: {}]
  %s4 = inlined_call_operand.vmem [shape: s32[24,1], index: 4, kind: input, shape index: {}]
  %s5 = inlined_call_operand.vmem [shape: s32[1,24], index: 5, kind: input, shape index: {}]
  %s6 = inlined_call_operand.hbm [shape: f32[3,8,128], index: 6, kind: output, shape index: {}]
  %s7 = sld [smem:[#allocation0]]
  $region57: #{tpu_custom_call.1} parent=0
    _
  %s9 = ssub.s32 1, %s7
  %s10 = scalar_select 0, %s9, %s7
  $region1: #{tpu_custom_call.1} parent=0
    #allocation2 [shape = 'u8[8192]{0}', space=vmem, size = 0x2000, scoped, tag = 'output window, operand 0']
    #allocation3 [shape = 's32[2]{0}', space=sflag, size = 0x8, scoped, tag = 'scoped memory for tpu_custom_call.1']
    %11 = vsyncpa [#allocation3], 0
    %s12 = scalar_lea.sflag [#allocation3], 1
    %13 = vsyncpa %s12, 0
    loop: start=0, step=1, limit=5
    $region2: #{tpu_custom_call.1} parent=1 // loop_pre_header
      _
    $region3: #{tpu_custom_call.1} parent=1 // loop_header
      %s15 = sphi 0, %s19
      %p16 = scmp.ge.s32.totalorder %s15, 5
      %s25 = sphi 0, %s27
      %s28 = sphi 0, %s25
      %s29 = sphi 0, %s28
      %s45 = sphi 0, %s29
      %s49 = sphi 0, %s49
      %s51 = sphi 0, %s49
      %s52 = sphi 0, %s51
      %s66 = sphi 0, %s52
      %s72 = sphi 0, %s74
      %s75 = sphi 0, %s72
      %s76 = sphi 0, %s75
      %s92 = sphi 0, %s76
      %s96 = sphi 0, %s96
      %s98 = sphi 0, %s96
      %s99 = sphi 0, %s98
      %s113 = sphi 0, %s99
      %s119 = sphi 0, %s121
      %s122 = sphi 0, %s119
      %s123 = sphi 0, %s122
      %s139 = sphi 0, %s123
      %s143 = sphi 0, %s143
      %s145 = sphi 0, %s143
      %s146 = sphi 0, %s145
      %s160 = sphi 0, %s146
      %s166 = sphi 0, %s168
      %s169 = sphi 0, %s166
      %s170 = sphi 0, %s169
      %s186 = sphi 0, %s170
    $region4: #{tpu_custom_call.1} parent=1 // loop_header_branch
      %18 = sbr.rel (%p16) target = $region8
    $region5: #{tpu_custom_call.1} parent=1 // loop_body
      %s20 = ssub.s32 %s15, 1
      %s21 = ssub.s32 %s15, 2
      %s22 = sadd.s32 %s15, 1
      %s23 = ssub.s32 %s15, %s22
      %p24 = scmp.eq.s32.totalorder %s23, 0
      %s26 = sadd.s32 %s25, 1
      %s27 = scalar_select %p24, %s25, %s26
      %p30 = pneg %p24
      %p31 = scmp.eq.s32.totalorder %s15, 2
      %p32 = por %p30, %p31
      %p33 = scmp.ne.s32.totalorder %s25, %s28
      %p34 = scmp.eq.s32.totalorder %s15, 0
      %p35 = por %p33, %p34
      %p36 = scmp.ne.s32.totalorder %s25, %s28
      %p37 = scmp.eq.s32.totalorder %s20, 2
      %p38 = por %p36, %p37
      %p39 = scmp.ne.s32.totalorder %s28, %s29
      %p40 = scmp.eq.s32.totalorder %s20, 0
      %p41 = por %p39, %p40
      %p42 = scmp.ne.s32.totalorder %s28, %s29
      %p43 = scmp.eq.s32.totalorder %s21, 2
      %p44 = por %p42, %p43
      %p46 = scmp.ne.s32.totalorder %s29, %s45
      %p47 = scmp.eq.s32.totalorder %s21, 0
      %p48 = por %p46, %p47
      %s50 = sadd.s32 %s49, 1
      %p53 = scmp.eq.s32.totalorder %s15, 2
      %p54 = scmp.ne.s32.totalorder %s49, %s51
      %p55 = scmp.eq.s32.totalorder %s15, 0
      %p56 = por %p54, %p55
      %p57 = scmp.ne.s32.totalorder %s49, %s51
      %p58 = scmp.eq.s32.totalorder %s20, 2
      %p59 = por %p57, %p58
      %p60 = scmp.ne.s32.totalorder %s51, %s52
      %p61 = scmp.eq.s32.totalorder %s20, 0
      %p62 = por %p60, %p61
      %p63 = scmp.ne.s32.totalorder %s51, %s52
      %p64 = scmp.eq.s32.totalorder %s21, 2
      %p65 = por %p63, %p64
      %p67 = scmp.ne.s32.totalorder %s52, %s66
      %p68 = scmp.eq.s32.totalorder %s21, 0
      %p69 = por %p67, %p68
      %s70 = ssub.s32 %s15, %s22
      %p71 = scmp.eq.s32.totalorder %s70, 0
      %s73 = sadd.s32 %s72, 1
      %s74 = scalar_select %p71, %s72, %s73
      %p77 = pneg %p71
      %p78 = scmp.eq.s32.totalorder %s15, 2
      %p79 = por %p77, %p78
      %p80 = scmp.ne.s32.totalorder %s72, %s75
      %p81 = scmp.eq.s32.totalorder %s15, 0
      %p82 = por %p80, %p81
      %p83 = scmp.ne.s32.totalorder %s72, %s75
      %p84 = scmp.eq.s32.totalorder %s20, 2
      %p85 = por %p83, %p84
      %p86 = scmp.ne.s32.totalorder %s75, %s76
      %p87 = scmp.eq.s32.totalorder %s20, 0
      %p88 = por %p86, %p87
      %p89 = scmp.ne.s32.totalorder %s75, %s76
      %p90 = scmp.eq.s32.totalorder %s21, 2
      %p91 = por %p89, %p90
      %p93 = scmp.ne.s32.totalorder %s76, %s92
      %p94 = scmp.eq.s32.totalorder %s21, 0
      %p95 = por %p93, %p94
      %s97 = sadd.s32 %s96, 1
      %p100 = scmp.eq.s32.totalorder %s15, 2
      %p101 = scmp.ne.s32.totalorder %s96, %s98
      %p102 = scmp.eq.s32.totalorder %s15, 0
      %p103 = por %p101, %p102
      %p104 = scmp.ne.s32.totalorder %s96, %s98
      %p105 = scmp.eq.s32.totalorder %s20, 2
      %p106 = por %p104, %p105
      %p107 = scmp.ne.s32.totalorder %s98, %s99
      %p108 = scmp.eq.s32.totalorder %s20, 0
      %p109 = por %p107, %p108
      %p110 = scmp.ne.s32.totalorder %s98, %s99
      %p111 = scmp.eq.s32.totalorder %s21, 2
      %p112 = por %p110, %p111
      %p114 = scmp.ne.s32.totalorder %s99, %s113
      %p115 = scmp.eq.s32.totalorder %s21, 0
      %p116 = por %p114, %p115
      %s117 = ssub.s32 %s15, %s22
      %p118 = scmp.eq.s32.totalorder %s117, 0
      %s120 = sadd.s32 %s119, 1
      %s121 = scalar_select %p118, %s119, %s120
      %p124 = pneg %p118
      %p125 = scmp.eq.s32.totalorder %s15, 2
      %p126 = por %p124, %p125
      %p127 = scmp.ne.s32.totalorder %s119, %s122
      %p128 = scmp.eq.s32.totalorder %s15, 0
      %p129 = por %p127, %p128
      %p130 = scmp.ne.s32.totalorder %s119, %s122
      %p131 = scmp.eq.s32.totalorder %s20, 2
      %p132 = por %p130, %p131
      %p133 = scmp.ne.s32.totalorder %s122, %s123
      %p134 = scmp.eq.s32.totalorder %s20, 0
      %p135 = por %p133, %p134
      %p136 = scmp.ne.s32.totalorder %s122, %s123
      %p137 = scmp.eq.s32.totalorder %s21, 2
      %p138 = por %p136, %p137
      %p140 = scmp.ne.s32.totalorder %s123, %s139
      %p141 = scmp.eq.s32.totalorder %s21, 0
      %p142 = por %p140, %p141
      %s144 = sadd.s32 %s143, 1
      %p147 = scmp.eq.s32.totalorder %s15, 2
      %p148 = scmp.ne.s32.totalorder %s143, %s145
      %p149 = scmp.eq.s32.totalorder %s15, 0
      %p150 = por %p148, %p149
      %p151 = scmp.ne.s32.totalorder %s143, %s145
      %p152 = scmp.eq.s32.totalorder %s20, 2
      %p153 = por %p151, %p152
      %p154 = scmp.ne.s32.totalorder %s145, %s146
      %p155 = scmp.eq.s32.totalorder %s20, 0
      %p156 = por %p154, %p155
      %p157 = scmp.ne.s32.totalorder %s145, %s146
      %p158 = scmp.eq.s32.totalorder %s21, 2
      %p159 = por %p157, %p158
      %p161 = scmp.ne.s32.totalorder %s146, %s160
      %p162 = scmp.eq.s32.totalorder %s21, 0
      %p163 = por %p161, %p162
      %s164 = ssub.s32 %s15, %s22
      %p165 = scmp.eq.s32.totalorder %s164, 0
      %s167 = sadd.s32 %s166, 1
      %s168 = scalar_select %p165, %s166, %s167
      %p171 = pneg %p165
      %p172 = scmp.eq.s32.totalorder %s15, 2
      %p173 = por %p171, %p172
      %p174 = scmp.ne.s32.totalorder %s166, %s169
      %p175 = scmp.eq.s32.totalorder %s15, 0
      %p176 = por %p174, %p175
      %p177 = scmp.ne.s32.totalorder %s166, %s169
      %p178 = scmp.eq.s32.totalorder %s20, 2
      %p179 = por %p177, %p178
      %p180 = scmp.ne.s32.totalorder %s169, %s170
      %p181 = scmp.eq.s32.totalorder %s20, 0
      %p182 = por %p180, %p181
      %p183 = scmp.ne.s32.totalorder %s169, %s170
      %p184 = scmp.eq.s32.totalorder %s21, 2
      %p185 = por %p183, %p184
      %p187 = scmp.ne.s32.totalorder %s170, %s186
      %p188 = scmp.eq.s32.totalorder %s21, 0
      %p189 = por %p187, %p188
      %p190 = scmp.le.s32.totalorder 1, %s15
      %p191 = scmp.lt.s32.totalorder %s15, 4
      %p192 = pnand %p190, %p191
      %p193 = pneg %p192
      // Predicated region
      $region9: #{tpu_custom_call.1} parent=5 // pred_check
        _
      $region10: #{tpu_custom_call.1} parent=5 // pred_check_branch
        %195 = sbr.rel (%p192) target = $region12
      $region11: #{tpu_custom_call.1} parent=5 // pred_region
        %s196 = ssub.s32 %s15, 1
        // Predicated region
        $region13: #{tpu_custom_call.1} parent=11 // pred_check
          %p197 = pneg %p62
        $region14: #{tpu_custom_call.1} parent=11 // pred_check_branch
          %199 = sbr.rel (%p197) target = $region16
        $region15: #{tpu_custom_call.1} parent=11 // pred_region
          _
        $region16: #{tpu_custom_call.1} parent=11 // pred_fallthru
          _
        // Predicated region
        $region17: #{tpu_custom_call.1} parent=11 // pred_check
          %p200 = pneg %p109
        $region18: #{tpu_custom_call.1} parent=11 // pred_check_branch
          %202 = sbr.rel (%p200) target = $region20
        $region19: #{tpu_custom_call.1} parent=11 // pred_region
          _
        $region20: #{tpu_custom_call.1} parent=11 // pred_fallthru
          _
        // Predicated region
        $region21: #{tpu_custom_call.1} parent=11 // pred_check
          %p203 = pneg %p156
        $region22: #{tpu_custom_call.1} parent=11 // pred_check_branch
          %205 = sbr.rel (%p203) target = $region24
        $region23: #{tpu_custom_call.1} parent=11 // pred_region
          _
        $region24: #{tpu_custom_call.1} parent=11 // pred_fallthru
          _
      $region12: #{tpu_custom_call.1} parent=5 // pred_fallthru
        _
      %p206 = scmp.lt.s32.totalorder %s15, 3
      // Predicated region
      $region25: #{tpu_custom_call.1} parent=5 // pred_check
        %p207 = pneg %p206
      $region26: #{tpu_custom_call.1} parent=5 // pred_check_branch
        %209 = sbr.rel (%p207) target = $region28
      $region27: #{tpu_custom_call.1} parent=5 // pred_region
        // Predicated region
        $region29: #{tpu_custom_call.1} parent=27 // pred_check
          %p210 = pneg %p35
        $region30: #{tpu_custom_call.1} parent=27 // pred_check_branch
          %212 = sbr.rel (%p210) target = $region32
        $region31: #{tpu_custom_call.1} parent=27 // pred_region
          %p213 = scmp.lt.s32.totalorder %s15, 2
          %s214 = scalar_select %p213, %s15, 2
          %s215 = smul.addr %s214, 8
          %s216 = scalar_lea.vmem %s0, %s215
        $region32: #{tpu_custom_call.1} parent=27 // pred_fallthru
          _
        // Predicated region
        $region33: #{tpu_custom_call.1} parent=27 // pred_check
          %p217 = pneg %p82
        $region34: #{tpu_custom_call.1} parent=27 // pred_check_branch
          %219 = sbr.rel (%p217) target = $region36
        $region35: #{tpu_custom_call.1} parent=27 // pred_region
          %p220 = scmp.lt.s32.totalorder %s15, 2
          %s221 = scalar_select %p220, %s15, 2
          %s222 = smul.addr %s221, 8
          %s223 = scalar_lea.vmem %s2, %s222
        $region36: #{tpu_custom_call.1} parent=27 // pred_fallthru
          _
        // Predicated region
        $region37: #{tpu_custom_call.1} parent=27 // pred_check
          %p224 = pneg %p129
        $region38: #{tpu_custom_call.1} parent=27 // pred_check_branch
          %226 = sbr.rel (%p224) target = $region40
        $region39: #{tpu_custom_call.1} parent=27 // pred_region
          %p227 = scmp.lt.s32.totalorder %s15, 2
          %s228 = scalar_select %p227, %s15, 2
          %s229 = smul.addr %s228, 8
          %s230 = scalar_lea.vmem %s4, %s229
        $region40: #{tpu_custom_call.1} parent=27 // pred_fallthru
          _
      $region28: #{tpu_custom_call.1} parent=5 // pred_fallthru
        _
      %p231 = scmp.le.s32.totalorder 1, %s15
      %p232 = scmp.lt.s32.totalorder %s15, 4
      %p233 = pnand %p231, %p232
      %p234 = pneg %p233
      // Predicated region
      $region41: #{tpu_custom_call.1} parent=5 // pred_check
        _
      $region42: #{tpu_custom_call.1} parent=5 // pred_check_branch
        %236 = sbr.rel (%p233) target = $region44
      $region43: #{tpu_custom_call.1} parent=5 // pred_region
        %s237 = ssub.s32 %s15, 1
        %p238 = scmp.lt.s32.totalorder %s20, 2
        %s239 = scalar_select %p238, %s20, 2
        %s240 = smul.addr %s239, 8
        %s241 = scalar_lea.vmem %s0, %s240
        %p242 = pneg %p41
        %p243 = pneg %p38
        %p244 = pneg %p62
        %p245 = pneg %p59
        %p246 = scmp.lt.s32.totalorder %s20, 2
        %s247 = scalar_select %p246, %s20, 2
        %s248 = smul.addr %s247, 8
        %s249 = scalar_lea.vmem %s2, %s248
        %p250 = pneg %p88
        %p251 = pneg %p85
        %p252 = pneg %p109
        %p253 = pneg %p106
        %p254 = scmp.lt.s32.totalorder %s20, 2
        %s255 = scalar_select %p254, %s20, 2
        %s256 = smul.addr %s255, 8
        %s257 = scalar_lea.vmem %s4, %s256
        %p258 = pneg %p135
        %p259 = pneg %p132
        %p260 = pneg %p156
        %p261 = pneg %p153
        %p262 = pneg %p182
        %p263 = pneg %p179
        %s264 = sand.u32 %s169, 1
        %s265 = scalar_lea.sflag [#allocation3], %s264
        %s266 = sand.u32 %s169, 1
        %s267 = smul.addr %s266, 8
        %s268 = scalar_lea.vmem [#allocation2], %s267
        %p269 = scmp.lt.s32.totalorder %s20, 2
        %s270 = scalar_select %p269, %s20, 2
        %s271 = smul.addr %s270, 8
        %s272 = scalar_lea.vmem %s0, %s271
        %p273 = scmp.lt.s32.totalorder %s20, 2
        %s274 = scalar_select %p273, %s20, 2
        %s275 = smul.addr %s274, 8
        %s276 = scalar_lea.vmem %s2, %s275
        %p277 = scmp.lt.s32.totalorder %s20, 2
        %s278 = scalar_select %p277, %s20, 2
        %s279 = smul.addr %s278, 8
        %s280 = scalar_lea.vmem %s4, %s279
        %v281 = vld [vmem:[%s276] sm:$0xff]
        %v282 = vld [vmem:[%s3] sm:$0x1]
        %v283 = vld [vmem:[%s280] sm:$0xff]
        %v284 = vld [vmem:[%s5] sm:$0x1]
        %v285 = vld [vmem:[%s272] sm:$0xff]
        %v286 = vld [vmem:[%s1] sm:$0xff]
        %v287 = vld [vmem:[%s1 + $0x8] sm:$0xff]
        %v288 = vld [vmem:[%s1 + $0x10] sm:$0xff]
        %vm289 = vcmask 523264
        %v291 = vsel %vm289, %v285, 0
        %v294 = vsel %vm289, %v286, 0
        %v297 = vsel %vm289, %v287, 0
        %v300 = vsel %vm289, %v288, 0
        %302 = vmatprep.subr.mxu0 0.0
        %303 = vmatpush1.xpose.msra.mxu0 %v294
        %304 = vmatprep.subr.mxu0 0.0
        %305 = vmatpush1.xpose.msra.mxu0 %v297
        %306 = vmatprep.subr.mxu0 0.0
        %307 = vmatpush1.xpose.msra.mxu0 %v300
        %308 = vmatprep.subr.mxu0 0.0
        %309 = vmatpush1.xpose.msra.mxu0 0.0
        %310 = vmatprep.subr.mxu0 0.0
        %311 = vmatpush1.xpose.msra.mxu0 0.0
        %312 = vmatprep.subr.mxu0 0.0
        %313 = vmatpush1.xpose.msra.mxu0 0.0
        %314 = vmatprep.subr.mxu0 0.0
        %315 = vmatpush1.xpose.msra.mxu0 0.0
        %316 = vmatprep.subr.mxu0 0.0
        %317 = vmatpush1.xpose.msra.mxu0 0.0
        %318 = vmatprep.subr.mxu0 0.0
        %319 = vmatpush1.xpose.msra.mxu0 0.0
        %320 = vmatprep.subr.mxu0 0.0
        %321 = vmatpush1.xpose.msra.mxu0 0.0
        %322 = vmatprep.subr.mxu0 0.0
        %323 = vmatpush1.xpose.msra.mxu0 0.0
        %324 = vmatprep.subr.mxu0 0.0
        %325 = vmatpush1.xpose.msra.mxu0 0.0
        %326 = vmatprep.subr.mxu0 0.0
        %327 = vmatpush1.xpose.msra.mxu0 0.0
        %328 = vmatprep.subr.mxu0 0.0
        %329 = vmatpush1.xpose.msra.mxu0 0.0
        %330 = vmatprep.subr.mxu0 0.0
        %331 = vmatpush1.xpose.msra.mxu0 0.0
        %332 = vmatprep.subr.mxu0 0.0
        %333 = vmatpush1.xpose.msra.mxu0 0.0
        %334 = vmatprep.subr.mxu0 0.0
        %335 = vmatpush1.xpose.msra.mxu0 0.0
        %336 = vmatprep.subr.mxu0 0.0
        %337 = vmatpush1.xpose.msra.mxu0 0.0
        %338 = vmatprep.subr.mxu0 0.0
        %339 = vmatpush1.xpose.msra.mxu0 0.0
        %340 = vmatprep.subr.mxu0 0.0
        %341 = vmatpush1.xpose.msra.mxu0 0.0
        %342 = vmatprep.subr.mxu0 0.0
        %343 = vmatpush1.xpose.msra.mxu0 0.0
        %344 = vmatprep.subr.mxu0 0.0
        %345 = vmatpush1.xpose.msra.mxu0 0.0
        %346 = vmatprep.subr.mxu0 0.0
        %347 = vmatpush1.xpose.msra.mxu0 0.0
        %348 = vmatprep.subr.mxu0 0.0
        %349 = vmatpush1.xpose.msra.mxu0 0.0
        %350 = vmatprep.subr.mxu0 0.0
        %351 = vmatpush1.xpose.msra.mxu0 0.0
        %352 = vmatprep.subr.mxu0 0.0
        %353 = vmatpush1.xpose.msra.mxu0 0.0
        %354 = vmatprep.subr.mxu0 0.0
        %355 = vmatpush1.xpose.msra.mxu0 0.0
        %356 = vmatprep.subr.mxu0 0.0
        %357 = vmatpush1.xpose.msra.mxu0 0.0
        %358 = vmatprep.subr.mxu0 0.0
        %359 = vmatpush1.xpose.msra.mxu0 0.0
        %360 = vmatprep.subr.mxu0 0.0
        %361 = vmatpush1.xpose.msra.mxu0 0.0
        %362 = vmatprep.subr.mxu0 0.0
        %363 = vmatpush1.xpose.msra.mxu0 0.0
        %364 = vmatprep.subr.mxu0 0.0
        %365 = vmatpush1.xpose.msra.mxu0 0.0
        %366 = vmatprep.mubr.f32.mxu0 0.0
        %367 = vmatmul.mubr.f32.gmra.mrb[0].mxu0 %v291
        %v368 = vpop.f32.mrb[0].mxu0
        %v369 = vadd.f32 0.0, %v368
        %v370 = vpop.f32.mrb[0].mxu0
        %371 = vdwg.mxu0
        %373 = vset.pattern.permute.xlu0 0
        %374 = vperm.xlu0 %373, %v281
        %v375 = vpop.permute.xlu0 %374
        %v378 = vlaneseq
        %v379 = vshrl.u32 %v378, 7
        %v380 = vsub.s32 0, %v379
        %v381 = vrot.slane %v282, %v380
        %v383 = vadd.f32 %v375, %v381
        %v384 = vmul.f32 %v369, 2.0
        %v385 = vsub.f32 %v383, %v384
        %v386 = vmax.f32 %v385, 1e-12
        %v387 = vrsqrt.pop %v386
        %v388 = vmul.f32 %v386, %v387
        %vm389 = vcmp.eq.f32.partialorder %v386, inf
        %v390 = vsel %vm389, %v386, %v388
        %vm391 = vcmp.eq.f32.partialorder %v386, 0.0
        %v392 = vand.u32 %v386, 2147483648
        %v393 = vsel %vm391, %v392, %v390
        %394 = vset.pattern.permute.xlu0 0
        %395 = vperm.xlu0 %394, %v283
        %v396 = vpop.permute.xlu0 %395
        %v397 = vlaneseq
        %v398 = vshrl.u32 %v397, 7
        %v399 = vsub.s32 0, %v398
        %v400 = vrot.slane %v284, %v399
        %vm401 = vcmp.eq.s32.totalorder %v396, %v400
        %v402 = vlaneseq
        %v403 = vand.u32 %v402, 127
        %vm404 = vcmp.lt.s32.totalorder %v403, 18
        %v405 = vsel %vm404, 1, 0
        %vm406 = vcmp.eq.s32.totalorder %v405, 1
        %vm407 = vmand %vm401, %vm406
        %vm408 = vmxor %vm401, 1
        %vm409 = vmand %vm408, %vm406
        %v410 = vsel %vm407, %v393, 0.0
        %vm411 = vcmask 195584
        %v412 = vsel %vm411, %v410, -inf
        %413 = vmax.xlane.f32.xlu0 %v412
        %v414 = vpop.xlane.xlu0 %413
        %v415 = vsub.f32 0.0, %v393
        %v416 = vsel %vm409, %v415, 0.0
        %v417 = vsel %vm411, %v416, -inf
        %418 = vmax.xlane.f32.xlu0 %v417
        %v419 = vpop.xlane.xlu0 %418
        %v420 = vsub.f32 %v393, %v414
        %v421 = vsub.f32 %v415, %v419
        %v422 = vsel %vm407, %v420, %v421
        %v423 = vmul.f32 %v422, 1.442695
        %v424 = vpow.pop %v423
        %v425 = vsel %vm407, %v424, 0.0
        %v426 = vsel %vm409, %v424, 0.0
        %v427 = vsel %vm411, %v425, 0.0
        %428 = vadd.xlane.f32.xlu0 %v427
        %v429 = vpop.xlane.xlu0 %428
        %v430 = vadd.f32 %v429, 1e-06
        %v431 = vsel %vm411, %v426, 0.0
        %432 = vadd.xlane.f32.xlu0 %v431
        %v433 = vpop.xlane.xlu0 %432
        %v434 = vadd.f32 %v433, 1e-06
        %v435 = vmul.f32 %v393, %v425
        %v436 = vsel %vm411, %v435, 0.0
        %437 = vadd.xlane.f32.xlu0 %v436
        %v438 = vpop.xlane.xlu0 %437
        %v439 = vrcp.pop %v430
        %v440 = vmul.f32 %v438, %v439
        %v441 = vmul.f32 %v393, %v426
        %v442 = vsel %vm411, %v441, 0.0
        %443 = vadd.xlane.f32.xlu0 %v442
        %v444 = vpop.xlane.xlu0 %443
        %v445 = vrcp.pop %v434
        %v446 = vmul.f32 %v444, %v445
        %v447 = vsub.f32 %v446, %v440
        %v448 = vsub.f32 0.0, %v447
        %v449 = vmax.f32 %v448, 0.0
        %v450 = vand.u32 2147483647, %v448
        %v451 = vsub.f32 0.0, %v450
        %v452 = vmul.f32 %v451, 1.442695
        %v453 = vpow.pop %v452
        %v454 = vadd.f32 %v453, 1.0
        %v455 = vlog2.pop %v454
        %v456 = vmul.f32 %v455, 0.6931472
        %v457 = vmul.f32 -0.5, %v453
        %v458 = vadd.f32 %v457, 1.0
        %v459 = vmul.f32 %v458, %v453
        %v460 = vand.u32 2147483647, %v453
        %vm461 = vcmp.lt.f32.partialorder %v460, 0.0004427343
        %v462 = vsel %vm461, %v459, %v456
        %v463 = vadd.f32 %v449, %v462
        %vm464 = vcmp.ge.f32.partialorder %v446, %v440
        %v465 = vsel %vm464, 1, 0
        %v466 = vcvt.s32.f32 %v465
        %s467 = smul.u32 %s20, 8
        %v468 = vlaneseq
        %v469 = vshrl.u32 %v468, 7
        %v470 = vstv %s467
        %v471 = vadd.s32 %v470, %v469
        %vm472 = vcmp.lt.s32.totalorder %v471, 18
        %v473 = vsel %vm472, %v463, 0.0
        %v474 = vsel %vm472, %v466, 0.0
        %v475 = vrot.slane %v473, 4
        %v476 = vadd.f32 %v473, %v475
        %v477 = vrot.slane %v476, 2
        %v478 = vadd.f32 %v476, %v477
        %v479 = vrot.slane %v478, 1
        %v480 = vadd.f32 %v478, %v479
        %v481 = vrot.slane %v474, 4
        %v482 = vadd.f32 %v474, %v481
        %v483 = vrot.slane %v482, 2
        %v484 = vadd.f32 %v482, %v483
        %v485 = vrot.slane %v484, 1
        %v486 = vadd.f32 %v484, %v485
        %vm487 = vcmp.eq.s32.totalorder %v469, 0
        %v488 = vsel %vm487, %v480, %v486
        %489 = vst [vmem:[%s268] sm:$0xff] %v488
        %s490 = sand.u32 %s169, 1
        %s491 = scalar_lea.sflag [#allocation3], %s490
        %s492 = sand.u32 %s169, 1
        %s493 = smul.addr %s492, 8
        %s494 = scalar_lea.vmem [#allocation2], %s493
        // Predicated region
        $region45: #{tpu_custom_call.1} parent=43 // pred_check
          %p495 = pneg %p179
        $region46: #{tpu_custom_call.1} parent=43 // pred_check_branch
          %497 = sbr.rel (%p495) target = $region48
        $region47: #{tpu_custom_call.1} parent=43 // pred_region
          %s499 = ssub.s32 128, 128
          %500 = vsyncadd %s491, %s499
          %s501 = smul.addr %s20, 128
          %s502 = scalar_lea.hbm %s6, %s501
          %s504 = sshll.u32 %s494, 4
          %s505 = int_to_ptr.vmem [resolvable:$true] %s504
          %507 = dma.vmem_to_hbm [thread:$0]  %s505, 128, %s502, %s491
        $region48: #{tpu_custom_call.1} parent=43 // pred_fallthru
          _
      $region44: #{tpu_custom_call.1} parent=5 // pred_fallthru
        _
      %p508 = scmp.le.s32.totalorder 2, %s15
      // Predicated region
      $region49: #{tpu_custom_call.1} parent=5 // pred_check
        %p509 = pneg %p508
      $region50: #{tpu_custom_call.1} parent=5 // pred_check_branch
        %511 = sbr.rel (%p509) target = $region52
      $region51: #{tpu_custom_call.1} parent=5 // pred_region
        %s512 = ssub.s32 %s15, 2
        // Predicated region
        $region53: #{tpu_custom_call.1} parent=51 // pred_check
          %p513 = pneg %p185
        $region54: #{tpu_custom_call.1} parent=51 // pred_check_branch
          %515 = sbr.rel (%p513) target = $region56
        $region55: #{tpu_custom_call.1} parent=51 // pred_region
          %s516 = sand.u32 %s170, 1
          %s517 = scalar_lea.sflag [#allocation3], %s516
          %s518 = sand.u32 %s170, 1
          %s519 = smul.addr %s518, 8
          %s520 = scalar_lea.vmem [#allocation2], %s519
          %521 = dma.done %s517, 128
        $region56: #{tpu_custom_call.1} parent=51 // pred_fallthru
          _
      $region52: #{tpu_custom_call.1} parent=5 // pred_fallthru
        _
    $region6: #{tpu_custom_call.1} parent=1 // loop_footer
      %s19 = sadd.s32 1, %s15
    $region7: #{tpu_custom_call.1} parent=1 // loop_footer_branch
      %14 = sbr.rel target = $region3
    $region8: #{tpu_custom_call.1} parent=1 // loop_exit
      _
    %522 = vsyncpa [#allocation3], 1
    %s523 = scalar_lea.sflag [#allocation3], 1
    %524 = vsyncpa %s523, 1

// kernel: tpu_custom_call.1
$region0: #{tpu_custom_call.1}
  #allocation0 [shape = 'u32[]', space=smem, size = 0x4, offset = 0x4, fixed_abs, tag = 'smem constant byte address 0x4 - core index']
  #allocation1 [shape = 'u32[144,128]{1,0:T(1,128)}', space=vmem, size = 0x12000, scoped, tag = 'internal scratch']
  %s0 = inlined_call_operand.vmem [shape: f32[24,64], index: 0, kind: input, shape index: {}]
  %s1 = inlined_call_operand.vmem [shape: f32[24,64], index: 1, kind: input, shape index: {}]
  %s2 = inlined_call_operand.vmem [shape: f32[24,1], index: 2, kind: input, shape index: {}]
  %s3 = inlined_call_operand.vmem [shape: f32[1,24], index: 3, kind: input, shape index: {}]
  %s4 = inlined_call_operand.vmem [shape: s32[24,1], index: 4, kind: input, shape index: {}]
  %s5 = inlined_call_operand.vmem [shape: s32[1,24], index: 5, kind: input, shape index: {}]
  %s6 = inlined_call_operand.hbm [shape: f32[3,8,128], index: 6, kind: output, shape index: {}]
  %s7 = sld [smem:[#allocation0]]
  $region57: #{tpu_custom_call.1} parent=0
    _
  %s9 = ssub.s32 1, %s7
  %s10 = scalar_select 0, %s9, %s7
  $region1: #{tpu_custom_call.1} parent=0
    #allocation2 [shape = 'u8[8192]{0}', space=vmem, size = 0x2000, scoped, tag = 'output window, operand 0']
    #allocation3 [shape = 's32[2]{0}', space=sflag, size = 0x8, scoped, tag = 'scoped memory for tpu_custom_call.1']
    %11 = vsyncpa [#allocation3], 0
    %s12 = scalar_lea.sflag [#allocation3], 1
    %13 = vsyncpa %s12, 0
    loop: start=0, step=1, limit=5
    $region2: #{tpu_custom_call.1} parent=1 // loop_pre_header
      _
    $region3: #{tpu_custom_call.1} parent=1 // loop_header
      %s15 = sphi 0, %s19
      %p16 = scmp.ge.s32.totalorder %s15, 5
      %s25 = sphi 0, %s27
      %s28 = sphi 0, %s25
      %s29 = sphi 0, %s28
      %s45 = sphi 0, %s29
      %s49 = sphi 0, %s49
      %s51 = sphi 0, %s49
      %s52 = sphi 0, %s51
      %s66 = sphi 0, %s52
      %s72 = sphi 0, %s74
      %s75 = sphi 0, %s72
      %s76 = sphi 0, %s75
      %s92 = sphi 0, %s76
      %s96 = sphi 0, %s96
      %s98 = sphi 0, %s96
      %s99 = sphi 0, %s98
      %s113 = sphi 0, %s99
      %s119 = sphi 0, %s121
      %s122 = sphi 0, %s119
      %s123 = sphi 0, %s122
      %s139 = sphi 0, %s123
      %s143 = sphi 0, %s143
      %s145 = sphi 0, %s143
      %s146 = sphi 0, %s145
      %s160 = sphi 0, %s146
      %s166 = sphi 0, %s168
      %s169 = sphi 0, %s166
      %s170 = sphi 0, %s169
      %s186 = sphi 0, %s170
    $region4: #{tpu_custom_call.1} parent=1 // loop_header_branch
      %18 = sbr.rel (%p16) target = $region8
    $region5: #{tpu_custom_call.1} parent=1 // loop_body
      %s20 = ssub.s32 %s15, 1
      %s21 = ssub.s32 %s15, 2
      %s22 = sadd.s32 %s15, 1
      %s23 = ssub.s32 %s15, %s22
      %p24 = scmp.eq.s32.totalorder %s23, 0
      %s26 = sadd.s32 %s25, 1
      %s27 = scalar_select %p24, %s25, %s26
      %p30 = pneg %p24
      %p31 = scmp.eq.s32.totalorder %s15, 2
      %p32 = por %p30, %p31
      %p33 = scmp.ne.s32.totalorder %s25, %s28
      %p34 = scmp.eq.s32.totalorder %s15, 0
      %p35 = por %p33, %p34
      %p36 = scmp.ne.s32.totalorder %s25, %s28
      %p37 = scmp.eq.s32.totalorder %s20, 2
      %p38 = por %p36, %p37
      %p39 = scmp.ne.s32.totalorder %s28, %s29
      %p40 = scmp.eq.s32.totalorder %s20, 0
      %p41 = por %p39, %p40
      %p42 = scmp.ne.s32.totalorder %s28, %s29
      %p43 = scmp.eq.s32.totalorder %s21, 2
      %p44 = por %p42, %p43
      %p46 = scmp.ne.s32.totalorder %s29, %s45
      %p47 = scmp.eq.s32.totalorder %s21, 0
      %p48 = por %p46, %p47
      %s50 = sadd.s32 %s49, 1
      %p53 = scmp.eq.s32.totalorder %s15, 2
      %p54 = scmp.ne.s32.totalorder %s49, %s51
      %p55 = scmp.eq.s32.totalorder %s15, 0
      %p56 = por %p54, %p55
      %p57 = scmp.ne.s32.totalorder %s49, %s51
      %p58 = scmp.eq.s32.totalorder %s20, 2
      %p59 = por %p57, %p58
      %p60 = scmp.ne.s32.totalorder %s51, %s52
      %p61 = scmp.eq.s32.totalorder %s20, 0
      %p62 = por %p60, %p61
      %p63 = scmp.ne.s32.totalorder %s51, %s52
      %p64 = scmp.eq.s32.totalorder %s21, 2
      %p65 = por %p63, %p64
      %p67 = scmp.ne.s32.totalorder %s52, %s66
      %p68 = scmp.eq.s32.totalorder %s21, 0
      %p69 = por %p67, %p68
      %s70 = ssub.s32 %s15, %s22
      %p71 = scmp.eq.s32.totalorder %s70, 0
      %s73 = sadd.s32 %s72, 1
      %s74 = scalar_select %p71, %s72, %s73
      %p77 = pneg %p71
      %p78 = scmp.eq.s32.totalorder %s15, 2
      %p79 = por %p77, %p78
      %p80 = scmp.ne.s32.totalorder %s72, %s75
      %p81 = scmp.eq.s32.totalorder %s15, 0
      %p82 = por %p80, %p81
      %p83 = scmp.ne.s32.totalorder %s72, %s75
      %p84 = scmp.eq.s32.totalorder %s20, 2
      %p85 = por %p83, %p84
      %p86 = scmp.ne.s32.totalorder %s75, %s76
      %p87 = scmp.eq.s32.totalorder %s20, 0
      %p88 = por %p86, %p87
      %p89 = scmp.ne.s32.totalorder %s75, %s76
      %p90 = scmp.eq.s32.totalorder %s21, 2
      %p91 = por %p89, %p90
      %p93 = scmp.ne.s32.totalorder %s76, %s92
      %p94 = scmp.eq.s32.totalorder %s21, 0
      %p95 = por %p93, %p94
      %s97 = sadd.s32 %s96, 1
      %p100 = scmp.eq.s32.totalorder %s15, 2
      %p101 = scmp.ne.s32.totalorder %s96, %s98
      %p102 = scmp.eq.s32.totalorder %s15, 0
      %p103 = por %p101, %p102
      %p104 = scmp.ne.s32.totalorder %s96, %s98
      %p105 = scmp.eq.s32.totalorder %s20, 2
      %p106 = por %p104, %p105
      %p107 = scmp.ne.s32.totalorder %s98, %s99
      %p108 = scmp.eq.s32.totalorder %s20, 0
      %p109 = por %p107, %p108
      %p110 = scmp.ne.s32.totalorder %s98, %s99
      %p111 = scmp.eq.s32.totalorder %s21, 2
      %p112 = por %p110, %p111
      %p114 = scmp.ne.s32.totalorder %s99, %s113
      %p115 = scmp.eq.s32.totalorder %s21, 0
      %p116 = por %p114, %p115
      %s117 = ssub.s32 %s15, %s22
      %p118 = scmp.eq.s32.totalorder %s117, 0
      %s120 = sadd.s32 %s119, 1
      %s121 = scalar_select %p118, %s119, %s120
      %p124 = pneg %p118
      %p125 = scmp.eq.s32.totalorder %s15, 2
      %p126 = por %p124, %p125
      %p127 = scmp.ne.s32.totalorder %s119, %s122
      %p128 = scmp.eq.s32.totalorder %s15, 0
      %p129 = por %p127, %p128
      %p130 = scmp.ne.s32.totalorder %s119, %s122
      %p131 = scmp.eq.s32.totalorder %s20, 2
      %p132 = por %p130, %p131
      %p133 = scmp.ne.s32.totalorder %s122, %s123
      %p134 = scmp.eq.s32.totalorder %s20, 0
      %p135 = por %p133, %p134
      %p136 = scmp.ne.s32.totalorder %s122, %s123
      %p137 = scmp.eq.s32.totalorder %s21, 2
      %p138 = por %p136, %p137
      %p140 = scmp.ne.s32.totalorder %s123, %s139
      %p141 = scmp.eq.s32.totalorder %s21, 0
      %p142 = por %p140, %p141
      %s144 = sadd.s32 %s143, 1
      %p147 = scmp.eq.s32.totalorder %s15, 2
      %p148 = scmp.ne.s32.totalorder %s143, %s145
      %p149 = scmp.eq.s32.totalorder %s15, 0
      %p150 = por %p148, %p149
      %p151 = scmp.ne.s32.totalorder %s143, %s145
      %p152 = scmp.eq.s32.totalorder %s20, 2
      %p153 = por %p151, %p152
      %p154 = scmp.ne.s32.totalorder %s145, %s146
      %p155 = scmp.eq.s32.totalorder %s20, 0
      %p156 = por %p154, %p155
      %p157 = scmp.ne.s32.totalorder %s145, %s146
      %p158 = scmp.eq.s32.totalorder %s21, 2
      %p159 = por %p157, %p158
      %p161 = scmp.ne.s32.totalorder %s146, %s160
      %p162 = scmp.eq.s32.totalorder %s21, 0
      %p163 = por %p161, %p162
      %s164 = ssub.s32 %s15, %s22
      %p165 = scmp.eq.s32.totalorder %s164, 0
      %s167 = sadd.s32 %s166, 1
      %s168 = scalar_select %p165, %s166, %s167
      %p171 = pneg %p165
      %p172 = scmp.eq.s32.totalorder %s15, 2
      %p173 = por %p171, %p172
      %p174 = scmp.ne.s32.totalorder %s166, %s169
      %p175 = scmp.eq.s32.totalorder %s15, 0
      %p176 = por %p174, %p175
      %p177 = scmp.ne.s32.totalorder %s166, %s169
      %p178 = scmp.eq.s32.totalorder %s20, 2
      %p179 = por %p177, %p178
      %p180 = scmp.ne.s32.totalorder %s169, %s170
      %p181 = scmp.eq.s32.totalorder %s20, 0
      %p182 = por %p180, %p181
      %p183 = scmp.ne.s32.totalorder %s169, %s170
      %p184 = scmp.eq.s32.totalorder %s21, 2
      %p185 = por %p183, %p184
      %p187 = scmp.ne.s32.totalorder %s170, %s186
      %p188 = scmp.eq.s32.totalorder %s21, 0
      %p189 = por %p187, %p188
      %p190 = scmp.le.s32.totalorder 1, %s15
      %p191 = scmp.lt.s32.totalorder %s15, 4
      %p192 = pnand %p190, %p191
      %p193 = pneg %p192
      // Predicated region
      $region9: #{tpu_custom_call.1} parent=5 // pred_check
        _
      $region10: #{tpu_custom_call.1} parent=5 // pred_check_branch
        %195 = sbr.rel (%p192) target = $region12
      $region11: #{tpu_custom_call.1} parent=5 // pred_region
        %s196 = ssub.s32 %s15, 1
        // Predicated region
        $region13: #{tpu_custom_call.1} parent=11 // pred_check
          %p197 = pneg %p62
        $region14: #{tpu_custom_call.1} parent=11 // pred_check_branch
          %199 = sbr.rel (%p197) target = $region16
        $region15: #{tpu_custom_call.1} parent=11 // pred_region
          _
        $region16: #{tpu_custom_call.1} parent=11 // pred_fallthru
          _
        // Predicated region
        $region17: #{tpu_custom_call.1} parent=11 // pred_check
          %p200 = pneg %p109
        $region18: #{tpu_custom_call.1} parent=11 // pred_check_branch
          %202 = sbr.rel (%p200) target = $region20
        $region19: #{tpu_custom_call.1} parent=11 // pred_region
          _
        $region20: #{tpu_custom_call.1} parent=11 // pred_fallthru
          _
        // Predicated region
        $region21: #{tpu_custom_call.1} parent=11 // pred_check
          %p203 = pneg %p156
        $region22: #{tpu_custom_call.1} parent=11 // pred_check_branch
          %205 = sbr.rel (%p203) target = $region24
        $region23: #{tpu_custom_call.1} parent=11 // pred_region
          _
        $region24: #{tpu_custom_call.1} parent=11 // pred_fallthru
          _
      $region12: #{tpu_custom_call.1} parent=5 // pred_fallthru
        _
      %p206 = scmp.lt.s32.totalorder %s15, 3
      // Predicated region
      $region25: #{tpu_custom_call.1} parent=5 // pred_check
        %p207 = pneg %p206
      $region26: #{tpu_custom_call.1} parent=5 // pred_check_branch
        %209 = sbr.rel (%p207) target = $region28
      $region27: #{tpu_custom_call.1} parent=5 // pred_region
        // Predicated region
        $region29: #{tpu_custom_call.1} parent=27 // pred_check
          %p210 = pneg %p35
        $region30: #{tpu_custom_call.1} parent=27 // pred_check_branch
          %212 = sbr.rel (%p210) target = $region32
        $region31: #{tpu_custom_call.1} parent=27 // pred_region
          %p213 = scmp.lt.s32.totalorder %s15, 2
          %s214 = scalar_select %p213, %s15, 2
          %s215 = smul.addr %s214, 8
          %s216 = scalar_lea.vmem %s0, %s215
        $region32: #{tpu_custom_call.1} parent=27 // pred_fallthru
          _
        // Predicated region
        $region33: #{tpu_custom_call.1} parent=27 // pred_check
          %p217 = pneg %p82
        $region34: #{tpu_custom_call.1} parent=27 // pred_check_branch
          %219 = sbr.rel (%p217) target = $region36
        $region35: #{tpu_custom_call.1} parent=27 // pred_region
          %p220 = scmp.lt.s32.totalorder %s15, 2
          %s221 = scalar_select %p220, %s15, 2
          %s222 = smul.addr %s221, 8
          %s223 = scalar_lea.vmem %s2, %s222
        $region36: #{tpu_custom_call.1} parent=27 // pred_fallthru
          _
        // Predicated region
        $region37: #{tpu_custom_call.1} parent=27 // pred_check
          %p224 = pneg %p129
        $region38: #{tpu_custom_call.1} parent=27 // pred_check_branch
          %226 = sbr.rel (%p224) target = $region40
        $region39: #{tpu_custom_call.1} parent=27 // pred_region
          %p227 = scmp.lt.s32.totalorder %s15, 2
          %s228 = scalar_select %p227, %s15, 2
          %s229 = smul.addr %s228, 8
          %s230 = scalar_lea.vmem %s4, %s229
        $region40: #{tpu_custom_call.1} parent=27 // pred_fallthru
          _
      $region28: #{tpu_custom_call.1} parent=5 // pred_fallthru
        _
      %p231 = scmp.le.s32.totalorder 1, %s15
      %p232 = scmp.lt.s32.totalorder %s15, 4
      %p233 = pnand %p231, %p232
      %p234 = pneg %p233
      // Predicated region
      $region41: #{tpu_custom_call.1} parent=5 // pred_check
        _
      $region42: #{tpu_custom_call.1} parent=5 // pred_check_branch
        %236 = sbr.rel (%p233) target = $region44
      $region43: #{tpu_custom_call.1} parent=5 // pred_region
        %s237 = ssub.s32 %s15, 1
        %p238 = scmp.lt.s32.totalorder %s20, 2
        %s239 = scalar_select %p238, %s20, 2
        %s240 = smul.addr %s239, 8
        %s241 = scalar_lea.vmem %s0, %s240
        %p242 = pneg %p41
        %p243 = pneg %p38
        %p244 = pneg %p62
        %p245 = pneg %p59
        %p246 = scmp.lt.s32.totalorder %s20, 2
        %s247 = scalar_select %p246, %s20, 2
        %s248 = smul.addr %s247, 8
        %s249 = scalar_lea.vmem %s2, %s248
        %p250 = pneg %p88
        %p251 = pneg %p85
        %p252 = pneg %p109
        %p253 = pneg %p106
        %p254 = scmp.lt.s32.totalorder %s20, 2
        %s255 = scalar_select %p254, %s20, 2
        %s256 = smul.addr %s255, 8
        %s257 = scalar_lea.vmem %s4, %s256
        %p258 = pneg %p135
        %p259 = pneg %p132
        %p260 = pneg %p156
        %p261 = pneg %p153
        %p262 = pneg %p182
        %p263 = pneg %p179
        %s264 = sand.u32 %s169, 1
        %s265 = scalar_lea.sflag [#allocation3], %s264
        %s266 = sand.u32 %s169, 1
        %s267 = smul.addr %s266, 8
        %s268 = scalar_lea.vmem [#allocation2], %s267
        %p269 = scmp.lt.s32.totalorder %s20, 2
        %s270 = scalar_select %p269, %s20, 2
        %s271 = smul.addr %s270, 8
        %s272 = scalar_lea.vmem %s0, %s271
        %p273 = scmp.lt.s32.totalorder %s20, 2
        %s274 = scalar_select %p273, %s20, 2
        %s275 = smul.addr %s274, 8
        %s276 = scalar_lea.vmem %s2, %s275
        %p277 = scmp.lt.s32.totalorder %s20, 2
        %s278 = scalar_select %p277, %s20, 2
        %s279 = smul.addr %s278, 8
        %s280 = scalar_lea.vmem %s4, %s279
        %v281 = vld [vmem:[%s276] sm:$0xff]
        %v282 = vld [vmem:[%s3] sm:$0x1]
        %v283 = vld [vmem:[%s280] sm:$0xff]
        %v284 = vld [vmem:[%s5] sm:$0x1]
        %v285 = vld [vmem:[%s272] sm:$0xff]
        %v286 = vld [vmem:[%s1] sm:$0xff]
        %v287 = vld [vmem:[%s1 + $0x8] sm:$0xff]
        %v288 = vld [vmem:[%s1 + $0x10] sm:$0xff]
        %vm289 = vcmask 523264
        %v291 = vsel %vm289, %v285, 0
        %v294 = vsel %vm289, %v286, 0
        %v297 = vsel %vm289, %v287, 0
        %v300 = vsel %vm289, %v288, 0
        %302 = vmatprep.subr.mxu0 0.0
        %303 = vmatpush1.xpose.msra.mxu0 %v294
        %304 = vmatprep.subr.mxu0 0.0
        %305 = vmatpush1.xpose.msra.mxu0 %v297
        %306 = vmatprep.subr.mxu0 0.0
        %307 = vmatpush1.xpose.msra.mxu0 %v300
        %308 = vmatprep.subr.mxu0 0.0
        %309 = vmatpush1.xpose.msra.mxu0 0.0
        %310 = vmatprep.subr.mxu0 0.0
        %311 = vmatpush1.xpose.msra.mxu0 0.0
        %312 = vmatprep.subr.mxu0 0.0
        %313 = vmatpush1.xpose.msra.mxu0 0.0
        %314 = vmatprep.subr.mxu0 0.0
        %315 = vmatpush1.xpose.msra.mxu0 0.0
        %316 = vmatprep.subr.mxu0 0.0
        %317 = vmatpush1.xpose.msra.mxu0 0.0
        %318 = vmatprep.subr.mxu0 0.0
        %319 = vmatpush1.xpose.msra.mxu0 0.0
        %320 = vmatprep.subr.mxu0 0.0
        %321 = vmatpush1.xpose.msra.mxu0 0.0
        %322 = vmatprep.subr.mxu0 0.0
        %323 = vmatpush1.xpose.msra.mxu0 0.0
        %324 = vmatprep.subr.mxu0 0.0
        %325 = vmatpush1.xpose.msra.mxu0 0.0
        %326 = vmatprep.subr.mxu0 0.0
        %327 = vmatpush1.xpose.msra.mxu0 0.0
        %328 = vmatprep.subr.mxu0 0.0
        %329 = vmatpush1.xpose.msra.mxu0 0.0
        %330 = vmatprep.subr.mxu0 0.0
        %331 = vmatpush1.xpose.msra.mxu0 0.0
        %332 = vmatprep.subr.mxu0 0.0
        %333 = vmatpush1.xpose.msra.mxu0 0.0
        %334 = vmatprep.subr.mxu0 0.0
        %335 = vmatpush1.xpose.msra.mxu0 0.0
        %336 = vmatprep.subr.mxu0 0.0
        %337 = vmatpush1.xpose.msra.mxu0 0.0
        %338 = vmatprep.subr.mxu0 0.0
        %339 = vmatpush1.xpose.msra.mxu0 0.0
        %340 = vmatprep.subr.mxu0 0.0
        %341 = vmatpush1.xpose.msra.mxu0 0.0
        %342 = vmatprep.subr.mxu0 0.0
        %343 = vmatpush1.xpose.msra.mxu0 0.0
        %344 = vmatprep.subr.mxu0 0.0
        %345 = vmatpush1.xpose.msra.mxu0 0.0
        %346 = vmatprep.subr.mxu0 0.0
        %347 = vmatpush1.xpose.msra.mxu0 0.0
        %348 = vmatprep.subr.mxu0 0.0
        %349 = vmatpush1.xpose.msra.mxu0 0.0
        %350 = vmatprep.subr.mxu0 0.0
        %351 = vmatpush1.xpose.msra.mxu0 0.0
        %352 = vmatprep.subr.mxu0 0.0
        %353 = vmatpush1.xpose.msra.mxu0 0.0
        %354 = vmatprep.subr.mxu0 0.0
        %355 = vmatpush1.xpose.msra.mxu0 0.0
        %356 = vmatprep.subr.mxu0 0.0
        %357 = vmatpush1.xpose.msra.mxu0 0.0
        %358 = vmatprep.subr.mxu0 0.0
        %359 = vmatpush1.xpose.msra.mxu0 0.0
        %360 = vmatprep.subr.mxu0 0.0
        %361 = vmatpush1.xpose.msra.mxu0 0.0
        %362 = vmatprep.subr.mxu0 0.0
        %363 = vmatpush1.xpose.msra.mxu0 0.0
        %364 = vmatprep.subr.mxu0 0.0
        %365 = vmatpush1.xpose.msra.mxu0 0.0
        %366 = vmatprep.mubr.f32.mxu0 0.0
        %367 = vmatmul.mubr.f32.gmra.mrb[0].mxu0 %v291
        %v368 = vpop.f32.mrb[0].mxu0
        %v369 = vadd.f32 0.0, %v368
        %v370 = vpop.f32.mrb[0].mxu0
        %371 = vdwg.mxu0
        %373 = vset.pattern.permute.xlu0 0
        %374 = vperm.xlu0 %373, %v281
        %v375 = vpop.permute.xlu0 %374
        %v378 = vlaneseq
        %v379 = vshrl.u32 %v378, 7
        %v380 = vsub.s32 0, %v379
        %v381 = vrot.slane %v282, %v380
        %v383 = vadd.f32 %v375, %v381
        %v384 = vmul.f32 %v369, 2.0
        %v385 = vsub.f32 %v383, %v384
        %v386 = vmax.f32 %v385, 1e-12
        %v387 = vrsqrt.pop %v386
        %v388 = vmul.f32 %v386, %v387
        %vm389 = vcmp.eq.f32.partialorder %v386, inf
        %v390 = vsel %vm389, %v386, %v388
        %vm391 = vcmp.eq.f32.partialorder %v386, 0.0
        %v392 = vand.u32 %v386, 2147483648
        %v393 = vsel %vm391, %v392, %v390
        %394 = vset.pattern.permute.xlu0 0
        %395 = vperm.xlu0 %394, %v283
        %v396 = vpop.permute.xlu0 %395
        %v397 = vlaneseq
        %v398 = vshrl.u32 %v397, 7
        %v399 = vsub.s32 0, %v398
        %v400 = vrot.slane %v284, %v399
        %vm401 = vcmp.eq.s32.totalorder %v396, %v400
        %v402 = vlaneseq
        %v403 = vand.u32 %v402, 127
        %vm404 = vcmp.lt.s32.totalorder %v403, 18
        %v405 = vsel %vm404, 1, 0
        %vm406 = vcmp.eq.s32.totalorder %v405, 1
        %vm407 = vmand %vm401, %vm406
        %vm408 = vmxor %vm401, 1
        %vm409 = vmand %vm408, %vm406
        %v410 = vsel %vm407, %v393, 0.0
        %vm411 = vcmask 195584
        %v412 = vsel %vm411, %v410, -inf
        %413 = vmax.xlane.f32.xlu0 %v412
        %v414 = vpop.xlane.xlu0 %413
        %v415 = vsub.f32 0.0, %v393
        %v416 = vsel %vm409, %v415, 0.0
        %v417 = vsel %vm411, %v416, -inf
        %418 = vmax.xlane.f32.xlu0 %v417
        %v419 = vpop.xlane.xlu0 %418
        %v420 = vsub.f32 %v393, %v414
        %v421 = vsub.f32 %v415, %v419
        %v422 = vsel %vm407, %v420, %v421
        %v423 = vmul.f32 %v422, 1.442695
        %v424 = vpow.pop %v423
        %v425 = vsel %vm407, %v424, 0.0
        %v426 = vsel %vm409, %v424, 0.0
        %v427 = vsel %vm411, %v425, 0.0
        %428 = vadd.xlane.f32.xlu0 %v427
        %v429 = vpop.xlane.xlu0 %428
        %v430 = vadd.f32 %v429, 1e-06
        %v431 = vsel %vm411, %v426, 0.0
        %432 = vadd.xlane.f32.xlu0 %v431
        %v433 = vpop.xlane.xlu0 %432
        %v434 = vadd.f32 %v433, 1e-06
        %v435 = vmul.f32 %v393, %v425
        %v436 = vsel %vm411, %v435, 0.0
        %437 = vadd.xlane.f32.xlu0 %v436
        %v438 = vpop.xlane.xlu0 %437
        %v439 = vrcp.pop %v430
        %v440 = vmul.f32 %v438, %v439
        %v441 = vmul.f32 %v393, %v426
        %v442 = vsel %vm411, %v441, 0.0
        %443 = vadd.xlane.f32.xlu0 %v442
        %v444 = vpop.xlane.xlu0 %443
        %v445 = vrcp.pop %v434
        %v446 = vmul.f32 %v444, %v445
        %v447 = vsub.f32 %v446, %v440
        %v448 = vsub.f32 0.0, %v447
        %v449 = vmax.f32 %v448, 0.0
        %v450 = vand.u32 2147483647, %v448
        %v451 = vsub.f32 0.0, %v450
        %v452 = vmul.f32 %v451, 1.442695
        %v453 = vpow.pop %v452
        %v454 = vadd.f32 %v453, 1.0
        %v455 = vlog2.pop %v454
        %v456 = vmul.f32 %v455, 0.6931472
        %v457 = vmul.f32 -0.5, %v453
        %v458 = vadd.f32 %v457, 1.0
        %v459 = vmul.f32 %v458, %v453
        %v460 = vand.u32 2147483647, %v453
        %vm461 = vcmp.lt.f32.partialorder %v460, 0.0004427343
        %v462 = vsel %vm461, %v459, %v456
        %v463 = vadd.f32 %v449, %v462
        %vm464 = vcmp.ge.f32.partialorder %v446, %v440
        %v465 = vsel %vm464, 1, 0
        %v466 = vcvt.s32.f32 %v465
        %s467 = smul.u32 %s20, 8
        %v468 = vlaneseq
        %v469 = vshrl.u32 %v468, 7
        %v470 = vstv %s467
        %v471 = vadd.s32 %v470, %v469
        %vm472 = vcmp.lt.s32.totalorder %v471, 18
        %v473 = vsel %vm472, %v463, 0.0
        %v474 = vsel %vm472, %v466, 0.0
        %v475 = vrot.slane %v473, 4
        %v476 = vadd.f32 %v473, %v475
        %v477 = vrot.slane %v476, 2
        %v478 = vadd.f32 %v476, %v477
        %v479 = vrot.slane %v478, 1
        %v480 = vadd.f32 %v478, %v479
        %v481 = vrot.slane %v474, 4
        %v482 = vadd.f32 %v474, %v481
        %v483 = vrot.slane %v482, 2
        %v484 = vadd.f32 %v482, %v483
        %v485 = vrot.slane %v484, 1
        %v486 = vadd.f32 %v484, %v485
        %vm487 = vcmp.eq.s32.totalorder %v469, 0
        %v488 = vsel %vm487, %v480, %v486
        %489 = vst [vmem:[%s268] sm:$0xff] %v488
        %s490 = sand.u32 %s169, 1
        %s491 = scalar_lea.sflag [#allocation3], %s490
        %s492 = sand.u32 %s169, 1
        %s493 = smul.addr %s492, 8
        %s494 = scalar_lea.vmem [#allocation2], %s493
        // Predicated region
        $region45: #{tpu_custom_call.1} parent=43 // pred_check
          %p495 = pneg %p179
        $region46: #{tpu_custom_call.1} parent=43 // pred_check_branch
          %497 = sbr.rel (%p495) target = $region48
        $region47: #{tpu_custom_call.1} parent=43 // pred_region
          %s499 = ssub.s32 128, 128
          %500 = vsyncadd %s491, %s499
          %s501 = smul.addr %s20, 128
          %s502 = scalar_lea.hbm %s6, %s501
          %s504 = sshll.u32 %s494, 4
          %s505 = int_to_ptr.vmem [resolvable:$true] %s504
          %507 = dma.vmem_to_hbm [thread:$0]  %s505, 128, %s502, %s491
        $region48: #{tpu_custom_call.1} parent=43 // pred_fallthru
          _
      $region44: #{tpu_custom_call.1} parent=5 // pred_fallthru
        _
      %p508 = scmp.le.s32.totalorder 2, %s15
      // Predicated region
      $region49: #{tpu_custom_call.1} parent=5 // pred_check
        %p509 = pneg %p508
      $region50: #{tpu_custom_call.1} parent=5 // pred_check_branch
        %511 = sbr.rel (%p509) target = $region52
      $region51: #{tpu_custom_call.1} parent=5 // pred_region
        %s512 = ssub.s32 %s15, 2
        // Predicated region
        $region53: #{tpu_custom_call.1} parent=51 // pred_check
          %p513 = pneg %p185
        $region54: #{tpu_custom_call.1} parent=51 // pred_check_branch
          %515 = sbr.rel (%p513) target = $region56
        $region55: #{tpu_custom_call.1} parent=51 // pred_region
          %s516 = sand.u32 %s170, 1
          %s517 = scalar_lea.sflag [#allocation3], %s516
          %s518 = sand.u32 %s170, 1
          %s519 = smul.addr %s518, 8
          %s520 = scalar_lea.vmem [#allocation2], %s519
          %521 = dma.done %s517, 128
        $region56: #{tpu_custom_call.1} parent=51 // pred_fallthru
          _
      $region52: #{tpu_custom_call.1} parent=5 // pred_fallthru
        _
    $region6: #{tpu_custom_call.1} parent=1 // loop_footer
      %s19 = sadd.s32 1, %s15
    $region7: #{tpu_custom_call.1} parent=1 // loop_footer_branch
      %14 = sbr.rel target = $region3
    $region8: #{tpu_custom_call.1} parent=1 // loop_exit
      _
    %522 = vsyncpa [#allocation3], 1
    %s523 = scalar_lea.sflag [#allocation3], 1
    %524 = vsyncpa %s523, 1

</llo_original>
